<compile_context>
chip_gen: v5e
topology: v5e:2x2
jax: 0.10.0
libtpu: 0.0.40
codegen_flags: <defaults>
</compile_context>

<pallas_src>
import jax
import jax.numpy as jnp
from jax.experimental import pallas as pl
from jax.experimental.pallas import tpu as pltpu

_KL_LANES = 128  # lane-dense slot for the per-sample KL scalar


def _round_up(n, m):
    return ((n + m - 1) // m) * m


def _pad2(a, rows, cols):
    return jnp.pad(a, ((0, rows - a.shape[0]), (0, cols - a.shape[1])))


def stage_kernel(x_ref, eps_ref,
                 wq1_ref, bq1_ref, wmu_ref, bmu_ref, wlv_ref, blv_ref,
                 wp1_ref, bp1_ref, wout_ref, bout_ref,
                 xrec_ref, packed_ref):
    # --- inference (q) deterministic block: Linear + ReLU (bf16 MXU, f32 acc) ---
    x = x_ref[...]                                                   # bf16 (TB, Dp)
    h_q = jnp.dot(x, wq1_ref[...],
                  preferred_element_type=jnp.float32) + bq1_ref[...]
    h_q = jnp.maximum(h_q, 0.0)
    h_q16 = h_q.astype(jnp.bfloat16)

    # --- stochastic layer q(z | h_q): Gaussian heads + reparameterization ---
    mu = jnp.dot(h_q16, wmu_ref[...],
                 preferred_element_type=jnp.float32) + bmu_ref[...]
    lv = jnp.dot(h_q16, wlv_ref[...],
                 preferred_element_type=jnp.float32) + blv_ref[...]

    std = jnp.exp(0.5 * lv)              # single EUP transcendental per element
    z = mu + std * eps_ref[...]
    var = std * std                      # == exp(lv) without a second exp

    # --- loss: KL(q(z|x) || p(z)) with p(z) = N(0, I) (top-stage prior) ---
    # Padded lanes contribute exactly 0 (mu=0, lv=0 -> 0.5*(1+0-1-0)=0).
    kl = 0.5 * jnp.sum(var + mu * mu - 1.0 - lv, axis=-1, keepdims=True)

    # --- generative (p) deterministic block: Linear + ReLU, then output head ---
    h_p = jnp.dot(z.astype(jnp.bfloat16), wp1_ref[...],
                  preferred_element_type=jnp.float32) + bp1_ref[...]
    h_p = jnp.maximum(h_p, 0.0)
    xrec = jnp.dot(h_p.astype(jnp.bfloat16), wout_ref[...],
                   preferred_element_type=jnp.float32) + bout_ref[...]

    # --- lane-dense writebacks (all 128-lane-aligned, unmasked stores) ---
    xrec_ref[...] = xrec
    zp = mu.shape[-1]
    packed_ref[:, 0:zp] = mu
    packed_ref[:, zp:2 * zp] = lv
    packed_ref[:, 2 * zp:3 * zp] = z
    packed_ref[:, 3 * zp:] = jnp.broadcast_to(
        kl, (kl.shape[0], packed_ref.shape[-1] - 3 * zp))


def stage_forward(x_nchw, eps, params):
    """Run one StageModule forward pass (infer + generate + KL) in Pallas."""
    B, C, H, W = x_nchw.shape
    D = C * H * W
    (wq1, bq1, wmu, bmu, wlv, blv, wp1, bp1, wout, bout) = params
    hidden = wq1.shape[1]
    Z = wmu.shape[1]

    # MXU / vreg friendly padded sizes.
    Dp = _round_up(D, 128)
    Hp = _round_up(hidden, 128)
    Zp = _round_up(Z, 128)
    TB = min(128, _round_up(B, 8))       # batch tile: multiple of 8 sublanes
    Bp = _round_up(B, TB)
    PACK = 3 * Zp + _KL_LANES

    # Zero-padding is semantically neutral (zero weight cols/rows, zero eps).
    x = jnp.pad(x_nchw.reshape(B, D).astype(jnp.float32),
                ((0, Bp - B), (0, Dp - D))).astype(jnp.bfloat16)
    eps_p = jnp.pad(eps.astype(jnp.float32), ((0, Bp - B), (0, Zp - Z)))

    wq1p = _pad2(wq1, Dp, Hp).astype(jnp.bfloat16)
    bq1p = _pad2(bq1, 1, Hp).astype(jnp.float32)
    wmup = _pad2(wmu, Hp, Zp).astype(jnp.bfloat16)
    bmup = _pad2(bmu, 1, Zp).astype(jnp.float32)
    wlvp = _pad2(wlv, Hp, Zp).astype(jnp.bfloat16)
    blvp = _pad2(blv, 1, Zp).astype(jnp.float32)
    wp1p = _pad2(wp1, Zp, Hp).astype(jnp.bfloat16)
    bp1p = _pad2(bp1, 1, Hp).astype(jnp.float32)
    woutp = _pad2(wout, Hp, Dp).astype(jnp.bfloat16)
    boutp = _pad2(bout, 1, Dp).astype(jnp.float32)

    grid = (Bp // TB,)
    tile_map = lambda i: (i, 0)      # batch-tiled activations / outputs
    const_map = lambda i: (0, 0)     # weights stay VMEM-resident across grid

    in_specs = [
        pl.BlockSpec((TB, Dp), tile_map),     # x
        pl.BlockSpec((TB, Zp), tile_map),     # eps
        pl.BlockSpec((Dp, Hp), const_map),    # wq1
        pl.BlockSpec((1, Hp), const_map),     # bq1
        pl.BlockSpec((Hp, Zp), const_map),    # wmu
        pl.BlockSpec((1, Zp), const_map),     # bmu
        pl.BlockSpec((Hp, Zp), const_map),    # wlv
        pl.BlockSpec((1, Zp), const_map),     # blv
        pl.BlockSpec((Zp, Hp), const_map),    # wp1
        pl.BlockSpec((1, Hp), const_map),     # bp1
        pl.BlockSpec((Hp, Dp), const_map),    # wout
        pl.BlockSpec((1, Dp), const_map),     # bout
    ]
    out_specs = (
        pl.BlockSpec((TB, Dp), tile_map),     # x_rec
        pl.BlockSpec((TB, PACK), tile_map),   # packed [mu | lv | z | kl*128]
    )
    out_shapes = (
        jax.ShapeDtypeStruct((Bp, Dp), jnp.float32),
        jax.ShapeDtypeStruct((Bp, PACK), jnp.float32),
    )

    flops = 2 * Bp * (Dp * Hp + 2 * Hp * Zp + Zp * Hp + Hp * Dp)
    bytes_accessed = (
        x.size * 2 + eps_p.size * 4
        + (wq1p.size + wmup.size + wlvp.size + wp1p.size + woutp.size) * 2
        + (bq1p.size + bmup.size + blvp.size + bp1p.size + boutp.size) * 4
        + Bp * Dp * 4 + Bp * PACK * 4
    )
    cost = pl.CostEstimate(flops=flops, transcendentals=Bp * Zp,
                           bytes_accessed=bytes_accessed)

    xrec_p, packed = pl.pallas_call(
        stage_kernel,
        out_shape=out_shapes,
        grid=grid,
        in_specs=in_specs,
        out_specs=out_specs,
        compiler_params=pltpu.CompilerParams(
            dimension_semantics=("parallel",)),
        cost_estimate=cost,
    )(x, eps_p, wq1p, bq1p, wmup, bmup, wlvp, blvp, wp1p, bp1p, woutp, boutp)

    x_rec = xrec_p[:B, :D].reshape(B, C, H, W)
    mu = packed[:B, 0:Z]
    lv = packed[:B, Zp:Zp + Z]
    z = packed[:B, 2 * Zp:2 * Zp + Z]
    kl = packed[:B, 3 * Zp]

    # StageData-like return: (q params, p params (std-normal prior), loss, metadata)
    stage_data = {
        "q": {"mu": mu, "logvar": lv, "z": z},
        "p": {"mu": jnp.zeros_like(mu), "logvar": jnp.zeros_like(lv)},
        "loss": kl,
        "metadata": None,
    }
    return x_rec, stage_data


def init_params(key, D, hidden, Z):
    ks = jax.random.split(key, 5)
    s = 0.05
    wq1 = s * jax.random.normal(ks[0], (D, hidden), jnp.float32)
    bq1 = jnp.zeros((1, hidden), jnp.float32)
    wmu = s * jax.random.normal(ks[1], (hidden, Z), jnp.float32)
    bmu = jnp.zeros((1, Z), jnp.float32)
    wlv = s * jax.random.normal(ks[2], (hidden, Z), jnp.float32)
    blv = jnp.zeros((1, Z), jnp.float32)
    wp1 = s * jax.random.normal(ks[3], (Z, hidden), jnp.float32)
    bp1 = jnp.zeros((1, hidden), jnp.float32)
    wout = s * jax.random.normal(ks[4], (hidden, D), jnp.float32)
    bout = jnp.zeros((1, D), jnp.float32)
    return (wq1, bq1, wmu, bmu, wlv, blv, wp1, bp1, wout, bout)


if __name__ == "__main__":
    # TODO(synk): base class is abstract; this is one concrete top-stage realization.
    key = jax.random.PRNGKey(0)
    k_x, k_eps, k_p = jax.random.split(key, 3)

    B, C, Hs, Ws = 2, 4, 16, 16          # NCHW input, as the VAE stage expects
    D = C * Hs * Ws
    hidden, Z = 32, 16

    x = jax.random.normal(k_x, (B, C, Hs, Ws), jnp.float32)
    eps = jax.random.normal(k_eps, (B, Z), jnp.float32)
    params = init_params(k_p, D, hidden, Z)

    x_rec, stage_data = stage_forward(x, eps, params)
    jax.block_until_ready((x_rec, stage_data["loss"]))

    assert x_rec.shape == (B, C, Hs, Ws)
    assert stage_data["q"]["z"].shape == (B, Z)
    assert stage_data["q"]["mu"].shape == (B, Z)
    assert stage_data["q"]["logvar"].shape == (B, Z)
    assert stage_data["loss"].shape == (B,)
    assert bool(jnp.all(jnp.isfinite(x_rec)))
    assert bool(jnp.all(jnp.isfinite(stage_data["loss"])))
    print("KERNEL_OK")
</pallas_src>

<mosaic_0001>
module attributes {stable_mosaic.version = 11 : i64} {
  func.func @stage_kernel(%arg0: i32, %arg1: memref<8x1024xbf16, #tpu.memory_space<vmem>>, %arg2: memref<8x128xf32, #tpu.memory_space<vmem>>, %arg3: memref<1024x128xbf16, #tpu.memory_space<vmem>>, %arg4: memref<1x128xf32, #tpu.memory_space<vmem>>, %arg5: memref<128x128xbf16, #tpu.memory_space<vmem>>, %arg6: memref<1x128xf32, #tpu.memory_space<vmem>>, %arg7: memref<128x128xbf16, #tpu.memory_space<vmem>>, %arg8: memref<1x128xf32, #tpu.memory_space<vmem>>, %arg9: memref<128x128xbf16, #tpu.memory_space<vmem>>, %arg10: memref<1x128xf32, #tpu.memory_space<vmem>>, %arg11: memref<128x1024xbf16, #tpu.memory_space<vmem>>, %arg12: memref<1x1024xf32, #tpu.memory_space<vmem>>, %arg13: memref<8x1024xf32, #tpu.memory_space<vmem>>, %arg14: memref<8x512xf32, #tpu.memory_space<vmem>>) attributes {dimension_semantics = [#tpu.dimension_semantics<parallel>], iteration_bounds = array<i64: 1>, scalar_prefetch = 0 : i64, scratch_operands = 0 : i64, tpu.core_type = #tpu.core_type<tc>, window_params = [{transform_indices = @transform_0, window_bounds = array<i64: 8, 1024>}, {transform_indices = @transform_1, window_bounds = array<i64: 8, 128>}, {pipeline_mode = #tpu.pipeline_mode<synchronous>, transform_indices = @transform_2, window_bounds = array<i64: 1024, 128>}, {pipeline_mode = #tpu.pipeline_mode<synchronous>, transform_indices = @transform_3, window_bounds = array<i64: 1, 128>}, {pipeline_mode = #tpu.pipeline_mode<synchronous>, transform_indices = @transform_4, window_bounds = array<i64: 128, 128>}, {pipeline_mode = #tpu.pipeline_mode<synchronous>, transform_indices = @transform_5, window_bounds = array<i64: 1, 128>}, {pipeline_mode = #tpu.pipeline_mode<synchronous>, transform_indices = @transform_6, window_bounds = array<i64: 128, 128>}, {pipeline_mode = #tpu.pipeline_mode<synchronous>, transform_indices = @transform_7, window_bounds = array<i64: 1, 128>}, {pipeline_mode = #tpu.pipeline_mode<synchronous>, transform_indices = @transform_8, window_bounds = array<i64: 128, 128>}, {pipeline_mode = #tpu.pipeline_mode<synchronous>, transform_indices = @transform_9, window_bounds = array<i64: 1, 128>}, {pipeline_mode = #tpu.pipeline_mode<synchronous>, transform_indices = @transform_10, window_bounds = array<i64: 128, 1024>}, {pipeline_mode = #tpu.pipeline_mode<synchronous>, transform_indices = @transform_11, window_bounds = array<i64: 1, 1024>}, {transform_indices = @transform_12, window_bounds = array<i64: 8, 1024>}, {transform_indices = @transform_13, window_bounds = array<i64: 8, 512>}]} {
    %c0 = arith.constant 0 : index
    %c0_0 = arith.constant 0 : index
    %0 = vector.load %arg1[%c0, %c0_0] : memref<8x1024xbf16, #tpu.memory_space<vmem>>, vector<8x1024xbf16>
    %c0_1 = arith.constant 0 : index
    %c0_2 = arith.constant 0 : index
    %1 = vector.load %arg3[%c0_1, %c0_2] : memref<1024x128xbf16, #tpu.memory_space<vmem>>, vector<1024x128xbf16>
    %cst = arith.constant dense<0.000000e+00> : vector<8x128xf32>
    %2 = tpu.matmul %0, %1, %cst {dimension_numbers = #tpu.dot_dimension_numbers<[1], [0], [0], [1], [0, 0, 1, 1], [], []>} : vector<8x1024xbf16>, vector<1024x128xbf16>, vector<8x128xf32> -> vector<8x128xf32>
    %c0_3 = arith.constant 0 : index
    %c0_4 = arith.constant 0 : index
    %3 = vector.load %arg4[%c0_3, %c0_4] : memref<1x128xf32, #tpu.memory_space<vmem>>, vector<1x128xf32>
    %4 = vector.broadcast %3 : vector<1x128xf32> to vector<8x128xf32>
    %5 = arith.addf %2, %4 : vector<8x128xf32>
    %cst_5 = arith.constant 0.000000e+00 : f32
    %6 = vector.broadcast %cst_5 : f32 to vector<8x128xf32>
    %7 = arith.maximumf %5, %6 : vector<8x128xf32>
    %8 = arith.truncf %7 : vector<8x128xf32> to vector<8x128xbf16>
    %c0_6 = arith.constant 0 : index
    %c0_7 = arith.constant 0 : index
    %9 = vector.load %arg5[%c0_6, %c0_7] : memref<128x128xbf16, #tpu.memory_space<vmem>>, vector<128x128xbf16>
    %cst_8 = arith.constant dense<0.000000e+00> : vector<8x128xf32>
    %10 = tpu.matmul %8, %9, %cst_8 {dimension_numbers = #tpu.dot_dimension_numbers<[1], [0], [0], [1], [0, 0, 1, 1], [], []>} : vector<8x128xbf16>, vector<128x128xbf16>, vector<8x128xf32> -> vector<8x128xf32>
    %c0_9 = arith.constant 0 : index
    %c0_10 = arith.constant 0 : index
    %11 = vector.load %arg6[%c0_9, %c0_10] : memref<1x128xf32, #tpu.memory_space<vmem>>, vector<1x128xf32>
    %12 = vector.broadcast %11 : vector<1x128xf32> to vector<8x128xf32>
    %13 = arith.addf %10, %12 : vector<8x128xf32>
    %c0_11 = arith.constant 0 : index
    %c0_12 = arith.constant 0 : index
    %14 = vector.load %arg7[%c0_11, %c0_12] : memref<128x128xbf16, #tpu.memory_space<vmem>>, vector<128x128xbf16>
    %cst_13 = arith.constant dense<0.000000e+00> : vector<8x128xf32>
    %15 = tpu.matmul %8, %14, %cst_13 {dimension_numbers = #tpu.dot_dimension_numbers<[1], [0], [0], [1], [0, 0, 1, 1], [], []>} : vector<8x128xbf16>, vector<128x128xbf16>, vector<8x128xf32> -> vector<8x128xf32>
    %c0_14 = arith.constant 0 : index
    %c0_15 = arith.constant 0 : index
    %16 = vector.load %arg8[%c0_14, %c0_15] : memref<1x128xf32, #tpu.memory_space<vmem>>, vector<1x128xf32>
    %17 = vector.broadcast %16 : vector<1x128xf32> to vector<8x128xf32>
    %18 = arith.addf %15, %17 : vector<8x128xf32>
    %cst_16 = arith.constant 5.000000e-01 : f32
    %19 = vector.broadcast %cst_16 : f32 to vector<8x128xf32>
    %20 = arith.mulf %19, %18 : vector<8x128xf32>
    %21 = math.exp %20 : vector<8x128xf32>
    %c0_17 = arith.constant 0 : index
    %c0_18 = arith.constant 0 : index
    %22 = vector.load %arg2[%c0_17, %c0_18] : memref<8x128xf32, #tpu.memory_space<vmem>>, vector<8x128xf32>
    %23 = arith.mulf %21, %22 : vector<8x128xf32>
    %24 = arith.addf %13, %23 : vector<8x128xf32>
    %25 = arith.mulf %21, %21 : vector<8x128xf32>
    %26 = arith.mulf %13, %13 : vector<8x128xf32>
    %27 = arith.addf %25, %26 : vector<8x128xf32>
    %cst_19 = arith.constant 1.000000e+00 : f32
    %28 = vector.broadcast %cst_19 : f32 to vector<8x128xf32>
    %29 = arith.subf %27, %28 : vector<8x128xf32>
    %30 = arith.subf %29, %18 : vector<8x128xf32>
    %cst_20 = arith.constant dense<0.000000e+00> : vector<8xf32>
    %31 = vector.multi_reduction <add>, %30, %cst_20 [1] : vector<8x128xf32> to vector<8xf32>
    %32 = vector.shape_cast %31 : vector<8xf32> to vector<8x1xf32>
    %cst_21 = arith.constant 5.000000e-01 : f32
    %33 = vector.broadcast %cst_21 : f32 to vector<8x1xf32>
    %34 = arith.mulf %33, %32 : vector<8x1xf32>
    %35 = arith.truncf %24 : vector<8x128xf32> to vector<8x128xbf16>
    %c0_22 = arith.constant 0 : index
    %c0_23 = arith.constant 0 : index
    %36 = vector.load %arg9[%c0_22, %c0_23] : memref<128x128xbf16, #tpu.memory_space<vmem>>, vector<128x128xbf16>
    %cst_24 = arith.constant dense<0.000000e+00> : vector<8x128xf32>
    %37 = tpu.matmul %35, %36, %cst_24 {dimension_numbers = #tpu.dot_dimension_numbers<[1], [0], [0], [1], [0, 0, 1, 1], [], []>} : vector<8x128xbf16>, vector<128x128xbf16>, vector<8x128xf32> -> vector<8x128xf32>
    %c0_25 = arith.constant 0 : index
    %c0_26 = arith.constant 0 : index
    %38 = vector.load %arg10[%c0_25, %c0_26] : memref<1x128xf32, #tpu.memory_space<vmem>>, vector<1x128xf32>
    %39 = vector.broadcast %38 : vector<1x128xf32> to vector<8x128xf32>
    %40 = arith.addf %37, %39 : vector<8x128xf32>
    %cst_27 = arith.constant 0.000000e+00 : f32
    %41 = vector.broadcast %cst_27 : f32 to vector<8x128xf32>
    %42 = arith.maximumf %40, %41 : vector<8x128xf32>
    %43 = arith.truncf %42 : vector<8x128xf32> to vector<8x128xbf16>
    %c0_28 = arith.constant 0 : index
    %c0_29 = arith.constant 0 : index
    %44 = vector.load %arg11[%c0_28, %c0_29] : memref<128x1024xbf16, #tpu.memory_space<vmem>>, vector<128x1024xbf16>
    %cst_30 = arith.constant dense<0.000000e+00> : vector<8x1024xf32>
    %45 = tpu.matmul %43, %44, %cst_30 {dimension_numbers = #tpu.dot_dimension_numbers<[1], [0], [0], [1], [0, 0, 1, 1], [], []>} : vector<8x128xbf16>, vector<128x1024xbf16>, vector<8x1024xf32> -> vector<8x1024xf32>
    %c0_31 = arith.constant 0 : index
    %c0_32 = arith.constant 0 : index
    %46 = vector.load %arg12[%c0_31, %c0_32] : memref<1x1024xf32, #tpu.memory_space<vmem>>, vector<1x1024xf32>
    %47 = vector.broadcast %46 : vector<1x1024xf32> to vector<8x1024xf32>
    %48 = arith.addf %45, %47 : vector<8x1024xf32>
    %c0_33 = arith.constant 0 : index
    %c0_34 = arith.constant 0 : index
    %49 = vector.load %arg13[%c0_33, %c0_34] : memref<8x1024xf32, #tpu.memory_space<vmem>>, vector<8x1024xf32>
    tpu.vector_store %arg13[%c0_33, %c0_34], %48 {strides = array<i32>} : memref<8x1024xf32, #tpu.memory_space<vmem>>, vector<8x1024xf32>,
    %c0_35 = arith.constant 0 : index
    %c0_36 = arith.constant 0 : index
    %50 = vector.load %arg14[%c0_35, %c0_36] : memref<8x512xf32, #tpu.memory_space<vmem>>, vector<8x128xf32>
    tpu.vector_store %arg14[%c0_35, %c0_36], %13 {strides = array<i32>} : memref<8x512xf32, #tpu.memory_space<vmem>>, vector<8x128xf32>,
    %c0_37 = arith.constant 0 : index
    %c128 = arith.constant 128 : index
    %51 = vector.load %arg14[%c0_37, %c128] : memref<8x512xf32, #tpu.memory_space<vmem>>, vector<8x128xf32>
    tpu.vector_store %arg14[%c0_37, %c128], %18 {strides = array<i32>} : memref<8x512xf32, #tpu.memory_space<vmem>>, vector<8x128xf32>,
    %c0_38 = arith.constant 0 : index
    %c256 = arith.constant 256 : index
    %52 = vector.load %arg14[%c0_38, %c256] : memref<8x512xf32, #tpu.memory_space<vmem>>, vector<8x128xf32>
    tpu.vector_store %arg14[%c0_38, %c256], %24 {strides = array<i32>} : memref<8x512xf32, #tpu.memory_space<vmem>>, vector<8x128xf32>,
    %53 = vector.shape_cast %34 : vector<8x1xf32> to vector<8x1xf32>
    %54 = vector.broadcast %53 : vector<8x1xf32> to vector<8x128xf32>
    %c0_39 = arith.constant 0 : index
    %c384 = arith.constant 384 : index
    %55 = vector.load %arg14[%c0_39, %c384] : memref<8x512xf32, #tpu.memory_space<vmem>>, vector<8x128xf32>
    tpu.vector_store %arg14[%c0_39, %c384], %54 {strides = array<i32>} : memref<8x512xf32, #tpu.memory_space<vmem>>, vector<8x128xf32>,
    return
  }
  func.func @transform_0(%arg0: i32) -> (i32, i32) {
    %c0_i32 = arith.constant 0 : i32
    %c0_i32_0 = arith.constant 0 : i32
    return %arg0, %c0_i32 : i32, i32
  }
  func.func @transform_1(%arg0: i32) -> (i32, i32) {
    %c0_i32 = arith.constant 0 : i32
    %c0_i32_0 = arith.constant 0 : i32
    return %arg0, %c0_i32 : i32, i32
  }
  func.func @transform_2(%arg0: i32) -> (i32, i32) {
    %c0_i32 = arith.constant 0 : i32
    %c0_i32_0 = arith.constant 0 : i32
    %c0_i32_1 = arith.constant 0 : i32
    return %c0_i32, %c0_i32_0 : i32, i32
  }
  func.func @transform_3(%arg0: i32) -> (i32, i32) {
    %c0_i32 = arith.constant 0 : i32
    %c0_i32_0 = arith.constant 0 : i32
    %c0_i32_1 = arith.constant 0 : i32
    return %c0_i32, %c0_i32_0 : i32, i32
  }
  func.func @transform_4(%arg0: i32) -> (i32, i32) {
    %c0_i32 = arith.constant 0 : i32
    %c0_i32_0 = arith.constant 0 : i32
    %c0_i32_1 = arith.constant 0 : i32
    return %c0_i32, %c0_i32_0 : i32, i32
  }
  func.func @transform_5(%arg0: i32) -> (i32, i32) {
    %c0_i32 = arith.constant 0 : i32
    %c0_i32_0 = arith.constant 0 : i32
    %c0_i32_1 = arith.constant 0 : i32
    return %c0_i32, %c0_i32_0 : i32, i32
  }
  func.func @transform_6(%arg0: i32) -> (i32, i32) {
    %c0_i32 = arith.constant 0 : i32
    %c0_i32_0 = arith.constant 0 : i32
    %c0_i32_1 = arith.constant 0 : i32
    return %c0_i32, %c0_i32_0 : i32, i32
  }
  func.func @transform_7(%arg0: i32) -> (i32, i32) {
    %c0_i32 = arith.constant 0 : i32
    %c0_i32_0 = arith.constant 0 : i32
    %c0_i32_1 = arith.constant 0 : i32
    return %c0_i32, %c0_i32_0 : i32, i32
  }
  func.func @transform_8(%arg0: i32) -> (i32, i32) {
    %c0_i32 = arith.constant 0 : i32
    %c0_i32_0 = arith.constant 0 : i32
    %c0_i32_1 = arith.constant 0 : i32
    return %c0_i32, %c0_i32_0 : i32, i32
  }
  func.func @transform_9(%arg0: i32) -> (i32, i32) {
    %c0_i32 = arith.constant 0 : i32
    %c0_i32_0 = arith.constant 0 : i32
    %c0_i32_1 = arith.constant 0 : i32
    return %c0_i32, %c0_i32_0 : i32, i32
  }
  func.func @transform_10(%arg0: i32) -> (i32, i32) {
    %c0_i32 = arith.constant 0 : i32
    %c0_i32_0 = arith.constant 0 : i32
    %c0_i32_1 = arith.constant 0 : i32
    return %c0_i32, %c0_i32_0 : i32, i32
  }
  func.func @transform_11(%arg0: i32) -> (i32, i32) {
    %c0_i32 = arith.constant 0 : i32
    %c0_i32_0 = arith.constant 0 : i32
    %c0_i32_1 = arith.constant 0 : i32
    return %c0_i32, %c0_i32_0 : i32, i32
  }
  func.func @transform_12(%arg0: i32) -> (i32, i32) {
    %c0_i32 = arith.constant 0 : i32
    %c0_i32_0 = arith.constant 0 : i32
    return %arg0, %c0_i32 : i32, i32
  }
  func.func @transform_13(%arg0: i32) -> (i32, i32) {
    %c0_i32 = arith.constant 0 : i32
    %c0_i32_0 = arith.constant 0 : i32
    return %arg0, %c0_i32 : i32, i32
  }
}

</mosaic_0001>

<llo_original>
// kernel: tpu_custom_call.1
$region0: #{tpu_custom_call.1}
  #allocation0 [shape = 'u32[]', space=smem, size = 0x4, offset = 0x4, fixed_abs, tag = 'smem constant byte address 0x4 - core index']
  #allocation1 [shape = 'u32[72,128]{1,0:T(1,128)}', space=vmem, size = 0x9000, scoped, tag = 'internal scratch']
  %s0 = inlined_call_operand.hbm [shape: bf16[8,1024], index: 0, kind: input, shape index: {}]
  %s1 = inlined_call_operand.hbm [shape: f32[8,128], index: 1, kind: input, shape index: {}]
  %s2 = inlined_call_operand.hbm [shape: bf16[1024,128], index: 2, kind: input, shape index: {}]
  %s3 = inlined_call_operand.vmem [shape: f32[1,128], index: 3, kind: input, shape index: {}]
  %s4 = inlined_call_operand.hbm [shape: bf16[128,128], index: 4, kind: input, shape index: {}]
  %s5 = inlined_call_operand.vmem [shape: f32[1,128], index: 5, kind: input, shape index: {}]
  %s6 = inlined_call_operand.hbm [shape: bf16[128,128], index: 6, kind: input, shape index: {}]
  %s7 = inlined_call_operand.hbm [shape: f32[1,128], index: 7, kind: input, shape index: {}]
  %s8 = inlined_call_operand.hbm [shape: bf16[128,128], index: 8, kind: input, shape index: {}]
  %s9 = inlined_call_operand.hbm [shape: f32[1,128], index: 9, kind: input, shape index: {}]
  %s10 = inlined_call_operand.hbm [shape: bf16[128,1024], index: 10, kind: input, shape index: {}]
  %s11 = inlined_call_operand.vmem [shape: f32[1,1024], index: 11, kind: input, shape index: {}]
  %s12 = inlined_call_operand.hbm [shape: f32[8,1024], index: 12, kind: output, shape index: {0}]
  %s13 = inlined_call_operand.hbm [shape: f32[8,512], index: 13, kind: output, shape index: {1}]
  %14 = xla_tuple %s12, %s13
  %s15 = sld [smem:[#allocation0]]
  $region102: #{tpu_custom_call.1} parent=0
    _
  %s17 = ssub.s32 1, %s15
  %s18 = scalar_select 0, %s17, %s15
  $region1: #{tpu_custom_call.1} parent=0
    #allocation2 [shape = 'u8[16384]{0}', space=vmem, size = 0x4000, scoped, tag = 'input window, operand 0, single buffered']
    #allocation3 [shape = 's32[1]{0}', space=sflag, size = 0x4, scoped, tag = 'scoped memory for tpu_custom_call.1']
    #allocation4 [shape = 's32[1]{0}', space=sflag, size = 0x4, scoped, tag = 'scoped memory for tpu_custom_call.1']
    #allocation5 [shape = 'u8[4096]{0}', space=vmem, size = 0x1000, scoped, tag = 'input window, operand 1, single buffered']
    #allocation6 [shape = 's32[1]{0}', space=sflag, size = 0x4, scoped, tag = 'scoped memory for tpu_custom_call.1']
    #allocation7 [shape = 'u8[262144]{0}', space=vmem, size = 0x40000, scoped, tag = 'input window, operand 2, single buffered']
    #allocation8 [shape = 'u8[32768]{0}', space=vmem, size = 0x8000, scoped, tag = 'input window, operand 4, single buffered']
    #allocation9 [shape = 's32[1]{0}', space=sflag, size = 0x4, scoped, tag = 'scoped memory for tpu_custom_call.1']
    #allocation10 [shape = 'u8[32768]{0}', space=vmem, size = 0x8000, scoped, tag = 'input window, operand 6, single buffered']
    #allocation11 [shape = 'u8[512]{0}', space=vmem, size = 0x400, scoped, tag = 'input window, operand 7, single buffered']
    #allocation12 [shape = 's32[1]{0}', space=sflag, size = 0x4, scoped, tag = 'scoped memory for tpu_custom_call.1']
    #allocation13 [shape = 'u8[32768]{0}', space=vmem, size = 0x8000, scoped, tag = 'input window, operand 8, single buffered']
    #allocation14 [shape = 'u8[512]{0}', space=vmem, size = 0x400, scoped, tag = 'input window, operand 9, single buffered']
    #allocation15 [shape = 's32[1]{0}', space=sflag, size = 0x4, scoped, tag = 'scoped memory for tpu_custom_call.1']
    #allocation16 [shape = 'u8[262144]{0}', space=vmem, size = 0x40000, scoped, tag = 'input window, operand 10, single buffered']
    #allocation17 [shape = 'u8[32768]{0}', space=vmem, size = 0x8000, scoped, tag = 'output window, operand 0, single buffered']
    #allocation18 [shape = 'u8[16384]{0}', space=vmem, size = 0x4000, scoped, tag = 'output window, operand 1, single buffered']
    #allocation19 [shape = 's32[1]{0}', space=sflag, size = 0x4, scoped, tag = 'scoped memory for tpu_custom_call.1']
    %19 = vsyncpa [#allocation3], 0
    %20 = vsyncpa [#allocation6], 0
    %21 = vsyncpa [#allocation9], 0
    %22 = vsyncpa [#allocation12], 0
    %23 = vsyncpa [#allocation15], 0
    %24 = vsyncpa [#allocation4], 0
    %25 = vsyncpa [#allocation19], 0
    // Predicated region
    $region2: #{tpu_custom_call.1} parent=1 // pred_check
      _
    $region3: #{tpu_custom_call.1} parent=1 // pred_check_branch
      %27 = sbr.rel (0) target = $region5
    $region4: #{tpu_custom_call.1} parent=1 // pred_region
      %29 = vsyncadd [#allocation3], 0
      %s31 = sshll.u32 %s0, 4
      %s32 = int_to_ptr.hbm [resolvable:$true] %s31
      %s33 = sshll.u32 [#allocation2], 4
      %s34 = int_to_ptr.vmem [resolvable:$true] %s33
      %36 = dma.hbm_to_vmem [thread:$0]  %s32, 512, %s34, [#allocation3]
    $region5: #{tpu_custom_call.1} parent=1 // pred_fallthru
      _
    // Predicated region
    $region6: #{tpu_custom_call.1} parent=1 // pred_check
      _
    $region7: #{tpu_custom_call.1} parent=1 // pred_check_branch
      %38 = sbr.rel (0) target = $region9
    $region8: #{tpu_custom_call.1} parent=1 // pred_region
      %40 = vsyncadd [#allocation6], 0
      %s42 = sshll.u32 %s1, 4
      %s43 = int_to_ptr.hbm [resolvable:$true] %s42
      %s44 = sshll.u32 [#allocation5], 4
      %s45 = int_to_ptr.vmem [resolvable:$true] %s44
      %47 = dma.hbm_to_vmem [thread:$0]  %s43, 128, %s45, [#allocation6]
    $region9: #{tpu_custom_call.1} parent=1 // pred_fallthru
      _
    // Predicated region
    $region10: #{tpu_custom_call.1} parent=1 // pred_check
      _
    $region11: #{tpu_custom_call.1} parent=1 // pred_check_branch
      %49 = sbr.rel (0) target = $region13
    $region12: #{tpu_custom_call.1} parent=1 // pred_region
      %51 = vsyncadd [#allocation6], 0
      %s52 = sshll.u32 %s2, 4
      %s53 = int_to_ptr.hbm [resolvable:$true] %s52
      %s54 = sshll.u32 [#allocation7], 4
      %s55 = int_to_ptr.vmem [resolvable:$true] %s54
      %60 = dma.hbm_to_vmem [thread:$0]  %s53, 8192, %s55, [#allocation6], 64, 64, 4
    $region13: #{tpu_custom_call.1} parent=1 // pred_fallthru
      _
    // Predicated region
    $region14: #{tpu_custom_call.1} parent=1 // pred_check
      _
    $region15: #{tpu_custom_call.1} parent=1 // pred_check_branch
      %62 = sbr.rel (0) target = $region17
    $region16: #{tpu_custom_call.1} parent=1 // pred_region
      _
    $region17: #{tpu_custom_call.1} parent=1 // pred_fallthru
      _
    // Predicated region
    $region18: #{tpu_custom_call.1} parent=1 // pred_check
      _
    $region19: #{tpu_custom_call.1} parent=1 // pred_check_branch
      %64 = sbr.rel (0) target = $region21
    $region20: #{tpu_custom_call.1} parent=1 // pred_region
      %66 = vsyncadd [#allocation9], 0
      %s67 = sshll.u32 %s4, 4
      %s68 = int_to_ptr.hbm [resolvable:$true] %s67
      %s69 = sshll.u32 [#allocation8], 4
      %s70 = int_to_ptr.vmem [resolvable:$true] %s69
      %75 = dma.hbm_to_vmem [thread:$0]  %s68, 1024, %s70, [#allocation9], 64, 64, 4
    $region21: #{tpu_custom_call.1} parent=1 // pred_fallthru
      _
    // Predicated region
    $region22: #{tpu_custom_call.1} parent=1 // pred_check
      _
    $region23: #{tpu_custom_call.1} parent=1 // pred_check_branch
      %77 = sbr.rel (0) target = $region25
    $region24: #{tpu_custom_call.1} parent=1 // pred_region
      _
    $region25: #{tpu_custom_call.1} parent=1 // pred_fallthru
      _
    // Predicated region
    $region26: #{tpu_custom_call.1} parent=1 // pred_check
      _
    $region27: #{tpu_custom_call.1} parent=1 // pred_check_branch
      %79 = sbr.rel (0) target = $region29
    $region28: #{tpu_custom_call.1} parent=1 // pred_region
      %81 = vsyncadd [#allocation9], 0
      %s82 = sshll.u32 %s6, 4
      %s83 = int_to_ptr.hbm [resolvable:$true] %s82
      %s84 = sshll.u32 [#allocation10], 4
      %s85 = int_to_ptr.vmem [resolvable:$true] %s84
      %90 = dma.hbm_to_vmem [thread:$0]  %s83, 1024, %s85, [#allocation9], 64, 64, 4
    $region29: #{tpu_custom_call.1} parent=1 // pred_fallthru
      _
    // Predicated region
    $region30: #{tpu_custom_call.1} parent=1 // pred_check
      _
    $region31: #{tpu_custom_call.1} parent=1 // pred_check_branch
      %92 = sbr.rel (0) target = $region33
    $region32: #{tpu_custom_call.1} parent=1 // pred_region
      %94 = vsyncadd [#allocation12], 0
      %s96 = sshll.u32 %s7, 4
      %s97 = int_to_ptr.hbm [resolvable:$true] %s96
      %s98 = sshll.u32 [#allocation11], 4
      %s99 = int_to_ptr.vmem [resolvable:$true] %s98
      %101 = dma.hbm_to_vmem [thread:$0]  %s97, 16, %s99, [#allocation12]
    $region33: #{tpu_custom_call.1} parent=1 // pred_fallthru
      _
    // Predicated region
    $region34: #{tpu_custom_call.1} parent=1 // pred_check
      _
    $region35: #{tpu_custom_call.1} parent=1 // pred_check_branch
      %103 = sbr.rel (0) target = $region37
    $region36: #{tpu_custom_call.1} parent=1 // pred_region
      %105 = vsyncadd [#allocation12], 0
      %s106 = sshll.u32 %s8, 4
      %s107 = int_to_ptr.hbm [resolvable:$true] %s106
      %s108 = sshll.u32 [#allocation13], 4
      %s109 = int_to_ptr.vmem [resolvable:$true] %s108
      %114 = dma.hbm_to_vmem [thread:$0]  %s107, 1024, %s109, [#allocation12], 64, 64, 4
    $region37: #{tpu_custom_call.1} parent=1 // pred_fallthru
      _
    // Predicated region
    $region38: #{tpu_custom_call.1} parent=1 // pred_check
      _
    $region39: #{tpu_custom_call.1} parent=1 // pred_check_branch
      %116 = sbr.rel (0) target = $region41
    $region40: #{tpu_custom_call.1} parent=1 // pred_region
      %118 = vsyncadd [#allocation15], 0
      %s120 = sshll.u32 %s9, 4
      %s121 = int_to_ptr.hbm [resolvable:$true] %s120
      %s122 = sshll.u32 [#allocation14], 4
      %s123 = int_to_ptr.vmem [resolvable:$true] %s122
      %125 = dma.hbm_to_vmem [thread:$0]  %s121, 16, %s123, [#allocation15]
    $region41: #{tpu_custom_call.1} parent=1 // pred_fallthru
      _
    // Predicated region
    $region42: #{tpu_custom_call.1} parent=1 // pred_check
      _
    $region43: #{tpu_custom_call.1} parent=1 // pred_check_branch
      %127 = sbr.rel (0) target = $region45
    $region44: #{tpu_custom_call.1} parent=1 // pred_region
      %129 = vsyncadd [#allocation15], 0
      %s130 = sshll.u32 %s10, 4
      %s131 = int_to_ptr.hbm [resolvable:$true] %s130
      %s132 = sshll.u32 [#allocation16], 4
      %s133 = int_to_ptr.vmem [resolvable:$true] %s132
      %138 = dma.hbm_to_vmem [thread:$0]  %s131, 8192, %s133, [#allocation15], 512, 512, 32
    $region45: #{tpu_custom_call.1} parent=1 // pred_fallthru
      _
    // Predicated region
    $region46: #{tpu_custom_call.1} parent=1 // pred_check
      _
    $region47: #{tpu_custom_call.1} parent=1 // pred_check_branch
      %140 = sbr.rel (0) target = $region49
    $region48: #{tpu_custom_call.1} parent=1 // pred_region
      _
    $region49: #{tpu_custom_call.1} parent=1 // pred_fallthru
      _
    // Predicated region
    $region50: #{tpu_custom_call.1} parent=1 // pred_check
      _
    $region51: #{tpu_custom_call.1} parent=1 // pred_check_branch
      %142 = sbr.rel (0) target = $region53
    $region52: #{tpu_custom_call.1} parent=1 // pred_region
      %144 = dma.done [#allocation3], 512
    $region53: #{tpu_custom_call.1} parent=1 // pred_fallthru
      _
    // Predicated region
    $region54: #{tpu_custom_call.1} parent=1 // pred_check
      _
    $region55: #{tpu_custom_call.1} parent=1 // pred_check_branch
      %146 = sbr.rel (0) target = $region57
    $region56: #{tpu_custom_call.1} parent=1 // pred_region
      %148 = dma.done [#allocation6], 128
    $region57: #{tpu_custom_call.1} parent=1 // pred_fallthru
      _
    // Predicated region
    $region58: #{tpu_custom_call.1} parent=1 // pred_check
      _
    $region59: #{tpu_custom_call.1} parent=1 // pred_check_branch
      %150 = sbr.rel (0) target = $region61
    $region60: #{tpu_custom_call.1} parent=1 // pred_region
      %152 = dma.done [#allocation6], 8192
    $region61: #{tpu_custom_call.1} parent=1 // pred_fallthru
      _
    // Predicated region
    $region62: #{tpu_custom_call.1} parent=1 // pred_check
      _
    $region63: #{tpu_custom_call.1} parent=1 // pred_check_branch
      %154 = sbr.rel (0) target = $region65
    $region64: #{tpu_custom_call.1} parent=1 // pred_region
      %156 = dma.done [#allocation9], 1024
    $region65: #{tpu_custom_call.1} parent=1 // pred_fallthru
      _
    // Predicated region
    $region66: #{tpu_custom_call.1} parent=1 // pred_check
      _
    $region67: #{tpu_custom_call.1} parent=1 // pred_check_branch
      %158 = sbr.rel (0) target = $region69
    $region68: #{tpu_custom_call.1} parent=1 // pred_region
      %160 = dma.done [#allocation9], 1024
    $region69: #{tpu_custom_call.1} parent=1 // pred_fallthru
      _
    // Predicated region
    $region70: #{tpu_custom_call.1} parent=1 // pred_check
      _
    $region71: #{tpu_custom_call.1} parent=1 // pred_check_branch
      %162 = sbr.rel (0) target = $region73
    $region72: #{tpu_custom_call.1} parent=1 // pred_region
      %164 = dma.done [#allocation12], 16
    $region73: #{tpu_custom_call.1} parent=1 // pred_fallthru
      _
    // Predicated region
    $region74: #{tpu_custom_call.1} parent=1 // pred_check
      _
    $region75: #{tpu_custom_call.1} parent=1 // pred_check_branch
      %166 = sbr.rel (0) target = $region77
    $region76: #{tpu_custom_call.1} parent=1 // pred_region
      %168 = dma.done [#allocation12], 1024
    $region77: #{tpu_custom_call.1} parent=1 // pred_fallthru
      _
    // Predicated region
    $region78: #{tpu_custom_call.1} parent=1 // pred_check
      _
    $region79: #{tpu_custom_call.1} parent=1 // pred_check_branch
      %170 = sbr.rel (0) target = $region81
    $region80: #{tpu_custom_call.1} parent=1 // pred_region
      %172 = dma.done [#allocation15], 16
    $region81: #{tpu_custom_call.1} parent=1 // pred_fallthru
      _
    // Predicated region
    $region82: #{tpu_custom_call.1} parent=1 // pred_check
      _
    $region83: #{tpu_custom_call.1} parent=1 // pred_check_branch
      %174 = sbr.rel (0) target = $region85
    $region84: #{tpu_custom_call.1} parent=1 // pred_region
      %176 = dma.done [#allocation15], 8192
    $region85: #{tpu_custom_call.1} parent=1 // pred_fallthru
      _
    %v177 = vld [vmem:[#allocation2] sm:$0xff]
    %v178 = vld [vmem:[#allocation2 + $0x8] sm:$0xff]
    %v179 = vld [vmem:[#allocation2 + $0x10] sm:$0xff]
    %v180 = vld [vmem:[#allocation2 + $0x18] sm:$0xff]
    %v181 = vld [vmem:[#allocation7] sm:$0xf]
    %v182 = vld [vmem:[#allocation7 + $0x4] sm:$0xf]
    %v183 = vld [vmem:[#allocation7 + $0x8] sm:$0xf]
    %v184 = vld [vmem:[#allocation7 + $0xc] sm:$0xf]
    %v185 = vld [vmem:[#allocation7 + $0x10] sm:$0xf]
    %v186 = vld [vmem:[#allocation7 + $0x14] sm:$0xf]
    %v187 = vld [vmem:[#allocation7 + $0x18] sm:$0xf]
    %v188 = vld [vmem:[#allocation7 + $0x1c] sm:$0xf]
    %v189 = vld [vmem:[#allocation7 + $0x20] sm:$0xf]
    %v190 = vld [vmem:[#allocation7 + $0x24] sm:$0xf]
    %v191 = vld [vmem:[#allocation7 + $0x28] sm:$0xf]
    %v192 = vld [vmem:[#allocation7 + $0x2c] sm:$0xf]
    %v193 = vld [vmem:[#allocation7 + $0x30] sm:$0xf]
    %v194 = vld [vmem:[#allocation7 + $0x34] sm:$0xf]
    %v195 = vld [vmem:[#allocation7 + $0x38] sm:$0xf]
    %v196 = vld [vmem:[#allocation7 + $0x3c] sm:$0xf]
    %v197 = vld [vmem:[#allocation7 + $0x40] sm:$0xf]
    %v198 = vld [vmem:[#allocation7 + $0x44] sm:$0xf]
    %v199 = vld [vmem:[#allocation7 + $0x48] sm:$0xf]
    %v200 = vld [vmem:[#allocation7 + $0x4c] sm:$0xf]
    %v201 = vld [vmem:[#allocation7 + $0x50] sm:$0xf]
    %v202 = vld [vmem:[#allocation7 + $0x54] sm:$0xf]
    %v203 = vld [vmem:[#allocation7 + $0x58] sm:$0xf]
    %v204 = vld [vmem:[#allocation7 + $0x5c] sm:$0xf]
    %v205 = vld [vmem:[#allocation7 + $0x60] sm:$0xf]
    %v206 = vld [vmem:[#allocation7 + $0x64] sm:$0xf]
    %v207 = vld [vmem:[#allocation7 + $0x68] sm:$0xf]
    %v208 = vld [vmem:[#allocation7 + $0x6c] sm:$0xf]
    %v209 = vld [vmem:[#allocation7 + $0x70] sm:$0xf]
    %v210 = vld [vmem:[#allocation7 + $0x74] sm:$0xf]
    %v211 = vld [vmem:[#allocation7 + $0x78] sm:$0xf]
    %v212 = vld [vmem:[#allocation7 + $0x7c] sm:$0xf]
    %v213 = vld [vmem:[#allocation7 + $0x80] sm:$0xf]
    %v214 = vld [vmem:[#allocation7 + $0x84] sm:$0xf]
    %v215 = vld [vmem:[#allocation7 + $0x88] sm:$0xf]
    %v216 = vld [vmem:[#allocation7 + $0x8c] sm:$0xf]
    %v217 = vld [vmem:[#allocation7 + $0x90] sm:$0xf]
    %v218 = vld [vmem:[#allocation7 + $0x94] sm:$0xf]
    %v219 = vld [vmem:[#allocation7 + $0x98] sm:$0xf]
    %v220 = vld [vmem:[#allocation7 + $0x9c] sm:$0xf]
    %v221 = vld [vmem:[#allocation7 + $0xa0] sm:$0xf]
    %v222 = vld [vmem:[#allocation7 + $0xa4] sm:$0xf]
    %v223 = vld [vmem:[#allocation7 + $0xa8] sm:$0xf]
    %v224 = vld [vmem:[#allocation7 + $0xac] sm:$0xf]
    %v225 = vld [vmem:[#allocation7 + $0xb0] sm:$0xf]
    %v226 = vld [vmem:[#allocation7 + $0xb4] sm:$0xf]
    %v227 = vld [vmem:[#allocation7 + $0xb8] sm:$0xf]
    %v228 = vld [vmem:[#allocation7 + $0xbc] sm:$0xf]
    %v229 = vld [vmem:[#allocation7 + $0xc0] sm:$0xf]
    %v230 = vld [vmem:[#allocation7 + $0xc4] sm:$0xf]
    %v231 = vld [vmem:[#allocation7 + $0xc8] sm:$0xf]
    %v232 = vld [vmem:[#allocation7 + $0xcc] sm:$0xf]
    %v233 = vld [vmem:[#allocation7 + $0xd0] sm:$0xf]
    %v234 = vld [vmem:[#allocation7 + $0xd4] sm:$0xf]
    %v235 = vld [vmem:[#allocation7 + $0xd8] sm:$0xf]
    %v236 = vld [vmem:[#allocation7 + $0xdc] sm:$0xf]
    %v237 = vld [vmem:[#allocation7 + $0xe0] sm:$0xf]
    %v238 = vld [vmem:[#allocation7 + $0xe4] sm:$0xf]
    %v239 = vld [vmem:[#allocation7 + $0xe8] sm:$0xf]
    %v240 = vld [vmem:[#allocation7 + $0xec] sm:$0xf]
    %v241 = vld [vmem:[#allocation7 + $0xf0] sm:$0xf]
    %v242 = vld [vmem:[#allocation7 + $0xf4] sm:$0xf]
    %v243 = vld [vmem:[#allocation7 + $0xf8] sm:$0xf]
    %v244 = vld [vmem:[#allocation7 + $0xfc] sm:$0xf]
    %v245 = vld [vmem:[#allocation7 + $0x100] sm:$0xf]
    %v246 = vld [vmem:[#allocation7 + $0x104] sm:$0xf]
    %v247 = vld [vmem:[#allocation7 + $0x108] sm:$0xf]
    %v248 = vld [vmem:[#allocation7 + $0x10c] sm:$0xf]
    %v249 = vld [vmem:[#allocation7 + $0x110] sm:$0xf]
    %v250 = vld [vmem:[#allocation7 + $0x114] sm:$0xf]
    %v251 = vld [vmem:[#allocation7 + $0x118] sm:$0xf]
    %v252 = vld [vmem:[#allocation7 + $0x11c] sm:$0xf]
    %v253 = vld [vmem:[#allocation7 + $0x120] sm:$0xf]
    %v254 = vld [vmem:[#allocation7 + $0x124] sm:$0xf]
    %v255 = vld [vmem:[#allocation7 + $0x128] sm:$0xf]
    %v256 = vld [vmem:[#allocation7 + $0x12c] sm:$0xf]
    %v257 = vld [vmem:[#allocation7 + $0x130] sm:$0xf]
    %v258 = vld [vmem:[#allocation7 + $0x134] sm:$0xf]
    %v259 = vld [vmem:[#allocation7 + $0x138] sm:$0xf]
    %v260 = vld [vmem:[#allocation7 + $0x13c] sm:$0xf]
    %v261 = vld [vmem:[#allocation7 + $0x140] sm:$0xf]
    %v262 = vld [vmem:[#allocation7 + $0x144] sm:$0xf]
    %v263 = vld [vmem:[#allocation7 + $0x148] sm:$0xf]
    %v264 = vld [vmem:[#allocation7 + $0x14c] sm:$0xf]
    %v265 = vld [vmem:[#allocation7 + $0x150] sm:$0xf]
    %v266 = vld [vmem:[#allocation7 + $0x154] sm:$0xf]
    %v267 = vld [vmem:[#allocation7 + $0x158] sm:$0xf]
    %v268 = vld [vmem:[#allocation7 + $0x15c] sm:$0xf]
    %v269 = vld [vmem:[#allocation7 + $0x160] sm:$0xf]
    %v270 = vld [vmem:[#allocation7 + $0x164] sm:$0xf]
    %v271 = vld [vmem:[#allocation7 + $0x168] sm:$0xf]
    %v272 = vld [vmem:[#allocation7 + $0x16c] sm:$0xf]
    %v273 = vld [vmem:[#allocation7 + $0x170] sm:$0xf]
    %v274 = vld [vmem:[#allocation7 + $0x174] sm:$0xf]
    %v275 = vld [vmem:[#allocation7 + $0x178] sm:$0xf]
    %v276 = vld [vmem:[#allocation7 + $0x17c] sm:$0xf]
    %v277 = vld [vmem:[#allocation7 + $0x180] sm:$0xf]
    %v278 = vld [vmem:[#allocation7 + $0x184] sm:$0xf]
    %v279 = vld [vmem:[#allocation7 + $0x188] sm:$0xf]
    %v280 = vld [vmem:[#allocation7 + $0x18c] sm:$0xf]
    %v281 = vld [vmem:[#allocation7 + $0x190] sm:$0xf]
    %v282 = vld [vmem:[#allocation7 + $0x194] sm:$0xf]
    %v283 = vld [vmem:[#allocation7 + $0x198] sm:$0xf]
    %v284 = vld [vmem:[#allocation7 + $0x19c] sm:$0xf]
    %v285 = vld [vmem:[#allocation7 + $0x1a0] sm:$0xf]
    %v286 = vld [vmem:[#allocation7 + $0x1a4] sm:$0xf]
    %v287 = vld [vmem:[#allocation7 + $0x1a8] sm:$0xf]
    %v288 = vld [vmem:[#allocation7 + $0x1ac] sm:$0xf]
    %v289 = vld [vmem:[#allocation7 + $0x1b0] sm:$0xf]
    %v290 = vld [vmem:[#allocation7 + $0x1b4] sm:$0xf]
    %v291 = vld [vmem:[#allocation7 + $0x1b8] sm:$0xf]
    %v292 = vld [vmem:[#allocation7 + $0x1bc] sm:$0xf]
    %v293 = vld [vmem:[#allocation7 + $0x1c0] sm:$0xf]
    %v294 = vld [vmem:[#allocation7 + $0x1c4] sm:$0xf]
    %v295 = vld [vmem:[#allocation7 + $0x1c8] sm:$0xf]
    %v296 = vld [vmem:[#allocation7 + $0x1cc] sm:$0xf]
    %v297 = vld [vmem:[#allocation7 + $0x1d0] sm:$0xf]
    %v298 = vld [vmem:[#allocation7 + $0x1d4] sm:$0xf]
    %v299 = vld [vmem:[#allocation7 + $0x1d8] sm:$0xf]
    %v300 = vld [vmem:[#allocation7 + $0x1dc] sm:$0xf]
    %v301 = vld [vmem:[#allocation7 + $0x1e0] sm:$0xf]
    %v302 = vld [vmem:[#allocation7 + $0x1e4] sm:$0xf]
    %v303 = vld [vmem:[#allocation7 + $0x1e8] sm:$0xf]
    %v304 = vld [vmem:[#allocation7 + $0x1ec] sm:$0xf]
    %v305 = vld [vmem:[#allocation7 + $0x1f0] sm:$0xf]
    %v306 = vld [vmem:[#allocation7 + $0x1f4] sm:$0xf]
    %v307 = vld [vmem:[#allocation7 + $0x1f8] sm:$0xf]
    %v308 = vld [vmem:[#allocation7 + $0x1fc] sm:$0xf]
    %v309 = vld [vmem:[%s3] sm:$0x1]
    %v311 = vperm.slane %v309, 0
    %v317 = vunpack.c.l.b16 %v177
    %v318 = vunpack.c.h.b16 %v177
    %v319 = vunpack.c.l.b16 %v178
    %v320 = vunpack.c.h.b16 %v178
    %v321 = vunpack.c.l.b16 %v179
    %v322 = vunpack.c.h.b16 %v179
    %v323 = vunpack.c.l.b16 %v180
    %v324 = vunpack.c.h.b16 %v180
    %v325 = vpack.c.b16 %v317, %v317
    %v326 = vpack.c.b16 %v318, %v318
    %v327 = vpack.c.b16 %v319, %v319
    %v328 = vpack.c.b16 %v320, %v320
    %v329 = vpack.c.b16 %v321, %v321
    %v330 = vpack.c.b16 %v322, %v322
    %v331 = vpack.c.b16 %v323, %v323
    %v332 = vpack.c.b16 %v324, %v324
    %v469 = vunpack.c.l.b16 %v181
    %v470 = vunpack.c.l.b16 %v182
    %v471 = vunpack.c.l.b16 %v183
    %v472 = vunpack.c.l.b16 %v184
    %v473 = vunpack.c.l.b16 %v185
    %v474 = vunpack.c.l.b16 %v186
    %v475 = vunpack.c.l.b16 %v187
    %v476 = vunpack.c.l.b16 %v188
    %v477 = vunpack.c.l.b16 %v189
    %v478 = vunpack.c.l.b16 %v190
    %v479 = vunpack.c.l.b16 %v191
    %v480 = vunpack.c.l.b16 %v192
    %v481 = vunpack.c.l.b16 %v193
    %v482 = vunpack.c.l.b16 %v194
    %v483 = vunpack.c.l.b16 %v195
    %v484 = vunpack.c.l.b16 %v196
    %v485 = vunpack.c.l.b16 %v197
    %v486 = vunpack.c.l.b16 %v198
    %v487 = vunpack.c.l.b16 %v199
    %v488 = vunpack.c.l.b16 %v200
    %v489 = vunpack.c.l.b16 %v201
    %v490 = vunpack.c.l.b16 %v202
    %v491 = vunpack.c.l.b16 %v203
    %v492 = vunpack.c.l.b16 %v204
    %v493 = vunpack.c.l.b16 %v205
    %v494 = vunpack.c.l.b16 %v206
    %v495 = vunpack.c.l.b16 %v207
    %v496 = vunpack.c.l.b16 %v208
    %v497 = vunpack.c.l.b16 %v209
    %v498 = vunpack.c.l.b16 %v210
    %v499 = vunpack.c.l.b16 %v211
    %v500 = vunpack.c.l.b16 %v212
    %v501 = vunpack.c.l.b16 %v213
    %v502 = vunpack.c.l.b16 %v214
    %v503 = vunpack.c.l.b16 %v215
    %v504 = vunpack.c.l.b16 %v216
    %v505 = vunpack.c.l.b16 %v217
    %v506 = vunpack.c.l.b16 %v218
    %v507 = vunpack.c.l.b16 %v219
    %v508 = vunpack.c.l.b16 %v220
    %v509 = vunpack.c.l.b16 %v221
    %v510 = vunpack.c.l.b16 %v222
    %v511 = vunpack.c.l.b16 %v223
    %v512 = vunpack.c.l.b16 %v224
    %v513 = vunpack.c.l.b16 %v225
    %v514 = vunpack.c.l.b16 %v226
    %v515 = vunpack.c.l.b16 %v227
    %v516 = vunpack.c.l.b16 %v228
    %v517 = vunpack.c.l.b16 %v229
    %v518 = vunpack.c.l.b16 %v230
    %v519 = vunpack.c.l.b16 %v231
    %v520 = vunpack.c.l.b16 %v232
    %v521 = vunpack.c.l.b16 %v233
    %v522 = vunpack.c.l.b16 %v234
    %v523 = vunpack.c.l.b16 %v235
    %v524 = vunpack.c.l.b16 %v236
    %v525 = vunpack.c.l.b16 %v237
    %v526 = vunpack.c.l.b16 %v238
    %v527 = vunpack.c.l.b16 %v239
    %v528 = vunpack.c.l.b16 %v240
    %v529 = vunpack.c.l.b16 %v241
    %v530 = vunpack.c.l.b16 %v242
    %v531 = vunpack.c.l.b16 %v243
    %v532 = vunpack.c.l.b16 %v244
    %v533 = vunpack.c.l.b16 %v245
    %v534 = vunpack.c.l.b16 %v246
    %v535 = vunpack.c.l.b16 %v247
    %v536 = vunpack.c.l.b16 %v248
    %v537 = vunpack.c.l.b16 %v249
    %v538 = vunpack.c.l.b16 %v250
    %v539 = vunpack.c.l.b16 %v251
    %v540 = vunpack.c.l.b16 %v252
    %v541 = vunpack.c.l.b16 %v253
    %v542 = vunpack.c.l.b16 %v254
    %v543 = vunpack.c.l.b16 %v255
    %v544 = vunpack.c.l.b16 %v256
    %v545 = vunpack.c.l.b16 %v257
    %v546 = vunpack.c.l.b16 %v258
    %v547 = vunpack.c.l.b16 %v259
    %v548 = vunpack.c.l.b16 %v260
    %v549 = vunpack.c.l.b16 %v261
    %v550 = vunpack.c.l.b16 %v262
    %v551 = vunpack.c.l.b16 %v263
    %v552 = vunpack.c.l.b16 %v264
    %v553 = vunpack.c.l.b16 %v265
    %v554 = vunpack.c.l.b16 %v266
    %v555 = vunpack.c.l.b16 %v267
    %v556 = vunpack.c.l.b16 %v268
    %v557 = vunpack.c.l.b16 %v269
    %v558 = vunpack.c.l.b16 %v270
    %v559 = vunpack.c.l.b16 %v271
    %v560 = vunpack.c.l.b16 %v272
    %v561 = vunpack.c.l.b16 %v273
    %v562 = vunpack.c.l.b16 %v274
    %v563 = vunpack.c.l.b16 %v275
    %v564 = vunpack.c.l.b16 %v276
    %v565 = vunpack.c.l.b16 %v277
    %v566 = vunpack.c.l.b16 %v278
    %v567 = vunpack.c.l.b16 %v279
    %v568 = vunpack.c.l.b16 %v280
    %v569 = vunpack.c.l.b16 %v281
    %v570 = vunpack.c.l.b16 %v282
    %v571 = vunpack.c.l.b16 %v283
    %v572 = vunpack.c.l.b16 %v284
    %v573 = vunpack.c.l.b16 %v285
    %v574 = vunpack.c.l.b16 %v286
    %v575 = vunpack.c.l.b16 %v287
    %v576 = vunpack.c.l.b16 %v288
    %v577 = vunpack.c.l.b16 %v289
    %v578 = vunpack.c.l.b16 %v290
    %v579 = vunpack.c.l.b16 %v291
    %v580 = vunpack.c.l.b16 %v292
    %v581 = vunpack.c.l.b16 %v293
    %v582 = vunpack.c.l.b16 %v294
    %v583 = vunpack.c.l.b16 %v295
    %v584 = vunpack.c.l.b16 %v296
    %v585 = vunpack.c.l.b16 %v297
    %v586 = vunpack.c.l.b16 %v298
    %v587 = vunpack.c.l.b16 %v299
    %v588 = vunpack.c.l.b16 %v300
    %v589 = vunpack.c.l.b16 %v301
    %v590 = vunpack.c.l.b16 %v302
    %v591 = vunpack.c.l.b16 %v303
    %v592 = vunpack.c.l.b16 %v304
    %v593 = vunpack.c.l.b16 %v305
    %v594 = vunpack.c.l.b16 %v306
    %v595 = vunpack.c.l.b16 %v307
    %v596 = vunpack.c.l.b16 %v308
    %v597 = vpack.c.b16 %v470, %v469
    %v598 = vpack.c.b16 %v472, %v471
    %v599 = vpack.c.b16 %v474, %v473
    %v600 = vpack.c.b16 %v476, %v475
    %v601 = vpack.c.b16 %v478, %v477
    %v602 = vpack.c.b16 %v480, %v479
    %v603 = vpack.c.b16 %v482, %v481
    %v604 = vpack.c.b16 %v484, %v483
    %v605 = vpack.c.b16 %v486, %v485
    %v606 = vpack.c.b16 %v488, %v487
    %v607 = vpack.c.b16 %v490, %v489
    %v608 = vpack.c.b16 %v492, %v491
    %v609 = vpack.c.b16 %v494, %v493
    %v610 = vpack.c.b16 %v496, %v495
    %v611 = vpack.c.b16 %v498, %v497
    %v612 = vpack.c.b16 %v500, %v499
    %v613 = vpack.c.b16 %v502, %v501
    %v614 = vpack.c.b16 %v504, %v503
    %v615 = vpack.c.b16 %v506, %v505
    %v616 = vpack.c.b16 %v508, %v507
    %v617 = vpack.c.b16 %v510, %v509
    %v618 = vpack.c.b16 %v512, %v511
    %v619 = vpack.c.b16 %v514, %v513
    %v620 = vpack.c.b16 %v516, %v515
    %v621 = vpack.c.b16 %v518, %v517
    %v622 = vpack.c.b16 %v520, %v519
    %v623 = vpack.c.b16 %v522, %v521
    %v624 = vpack.c.b16 %v524, %v523
    %v625 = vpack.c.b16 %v526, %v525
    %v626 = vpack.c.b16 %v528, %v527
    %v627 = vpack.c.b16 %v530, %v529
    %v628 = vpack.c.b16 %v532, %v531
    %v629 = vpack.c.b16 %v534, %v533
    %v630 = vpack.c.b16 %v536, %v535
    %v631 = vpack.c.b16 %v538, %v537
    %v632 = vpack.c.b16 %v540, %v539
    %v633 = vpack.c.b16 %v542, %v541
    %v634 = vpack.c.b16 %v544, %v543
    %v635 = vpack.c.b16 %v546, %v545
    %v636 = vpack.c.b16 %v548, %v547
    %v637 = vpack.c.b16 %v550, %v549
    %v638 = vpack.c.b16 %v552, %v551
    %v639 = vpack.c.b16 %v554, %v553
    %v640 = vpack.c.b16 %v556, %v555
    %v641 = vpack.c.b16 %v558, %v557
    %v642 = vpack.c.b16 %v560, %v559
    %v643 = vpack.c.b16 %v562, %v561
    %v644 = vpack.c.b16 %v564, %v563
    %v645 = vpack.c.b16 %v566, %v565
    %v646 = vpack.c.b16 %v568, %v567
    %v647 = vpack.c.b16 %v570, %v569
    %v648 = vpack.c.b16 %v572, %v571
    %v649 = vpack.c.b16 %v574, %v573
    %v650 = vpack.c.b16 %v576, %v575
    %v651 = vpack.c.b16 %v578, %v577
    %v652 = vpack.c.b16 %v580, %v579
    %v653 = vpack.c.b16 %v582, %v581
    %v654 = vpack.c.b16 %v584, %v583
    %v655 = vpack.c.b16 %v586, %v585
    %v656 = vpack.c.b16 %v588, %v587
    %v657 = vpack.c.b16 %v590, %v589
    %v658 = vpack.c.b16 %v592, %v591
    %v659 = vpack.c.b16 %v594, %v593
    %v660 = vpack.c.b16 %v596, %v595
    %725 = vmatpush.bf16.msra.mxu0 %v604
    %726 = vmatpush.bf16.msra.mxu0 %v603
    %727 = vmatpush.bf16.msra.mxu0 %v602
    %728 = vmatpush.bf16.msra.mxu0 %v601
    %729 = vmatpush.bf16.msra.mxu0 %v600
    %730 = vmatpush.bf16.msra.mxu0 %v599
    %731 = vmatpush.bf16.msra.mxu0 %v598
    %732 = vmatpush.bf16.msra.mxu0 %v597
    %733 = vmatmul.bf16.gmra.mxu0 %v325
    %v734 = vpop.f32.mrf.mxu0
    %v735 = vadd.f32 %v311, %v734
    %v736 = vpop.f32.mrf.mxu0
    %737 = vdwg.mxu0
    %738 = vmatpush.bf16.msra.mxu0 %v612
    %739 = vmatpush.bf16.msra.mxu0 %v611
    %740 = vmatpush.bf16.msra.mxu0 %v610
    %741 = vmatpush.bf16.msra.mxu0 %v609
    %742 = vmatpush.bf16.msra.mxu0 %v608
    %743 = vmatpush.bf16.msra.mxu0 %v607
    %744 = vmatpush.bf16.msra.mxu0 %v606
    %745 = vmatpush.bf16.msra.mxu0 %v605
    %746 = vmatmul.bf16.gmra.mxu0 %v326
    %v747 = vpop.f32.mrf.mxu0
    %v748 = vadd.f32 %v735, %v747
    %v749 = vpop.f32.mrf.mxu0
    %750 = vdwg.mxu0
    %751 = vmatpush.bf16.msra.mxu0 %v620
    %752 = vmatpush.bf16.msra.mxu0 %v619
    %753 = vmatpush.bf16.msra.mxu0 %v618
    %754 = vmatpush.bf16.msra.mxu0 %v617
    %755 = vmatpush.bf16.msra.mxu0 %v616
    %756 = vmatpush.bf16.msra.mxu0 %v615
    %757 = vmatpush.bf16.msra.mxu0 %v614
    %758 = vmatpush.bf16.msra.mxu0 %v613
    %759 = vmatmul.bf16.gmra.mxu0 %v327
    %v760 = vpop.f32.mrf.mxu0
    %v761 = vadd.f32 %v748, %v760
    %v762 = vpop.f32.mrf.mxu0
    %763 = vdwg.mxu0
    %764 = vmatpush.bf16.msra.mxu0 %v628
    %765 = vmatpush.bf16.msra.mxu0 %v627
    %766 = vmatpush.bf16.msra.mxu0 %v626
    %767 = vmatpush.bf16.msra.mxu0 %v625
    %768 = vmatpush.bf16.msra.mxu0 %v624
    %769 = vmatpush.bf16.msra.mxu0 %v623
    %770 = vmatpush.bf16.msra.mxu0 %v622
    %771 = vmatpush.bf16.msra.mxu0 %v621
    %772 = vmatmul.bf16.gmra.mxu0 %v328
    %v773 = vpop.f32.mrf.mxu0
    %v774 = vadd.f32 %v761, %v773
    %v775 = vpop.f32.mrf.mxu0
    %776 = vdwg.mxu0
    %777 = vmatpush.bf16.msra.mxu0 %v636
    %778 = vmatpush.bf16.msra.mxu0 %v635
    %779 = vmatpush.bf16.msra.mxu0 %v634
    %780 = vmatpush.bf16.msra.mxu0 %v633
    %781 = vmatpush.bf16.msra.mxu0 %v632
    %782 = vmatpush.bf16.msra.mxu0 %v631
    %783 = vmatpush.bf16.msra.mxu0 %v630
    %784 = vmatpush.bf16.msra.mxu0 %v629
    %785 = vmatmul.bf16.gmra.mxu0 %v329
    %v786 = vpop.f32.mrf.mxu0
    %v787 = vadd.f32 %v774, %v786
    %v788 = vpop.f32.mrf.mxu0
    %789 = vdwg.mxu0
    %790 = vmatpush.bf16.msra.mxu0 %v644
    %791 = vmatpush.bf16.msra.mxu0 %v643
    %792 = vmatpush.bf16.msra.mxu0 %v642
    %793 = vmatpush.bf16.msra.mxu0 %v641
    %794 = vmatpush.bf16.msra.mxu0 %v640
    %795 = vmatpush.bf16.msra.mxu0 %v639
    %796 = vmatpush.bf16.msra.mxu0 %v638
    %797 = vmatpush.bf16.msra.mxu0 %v637
    %798 = vmatmul.bf16.gmra.mxu0 %v330
    %v799 = vpop.f32.mrf.mxu0
    %v800 = vadd.f32 %v787, %v799
    %v801 = vpop.f32.mrf.mxu0
    %802 = vdwg.mxu0
    %803 = vmatpush.bf16.msra.mxu0 %v652
    %804 = vmatpush.bf16.msra.mxu0 %v651
    %805 = vmatpush.bf16.msra.mxu0 %v650
    %806 = vmatpush.bf16.msra.mxu0 %v649
    %807 = vmatpush.bf16.msra.mxu0 %v648
    %808 = vmatpush.bf16.msra.mxu0 %v647
    %809 = vmatpush.bf16.msra.mxu0 %v646
    %810 = vmatpush.bf16.msra.mxu0 %v645
    %811 = vmatmul.bf16.gmra.mxu0 %v331
    %v812 = vpop.f32.mrf.mxu0
    %v813 = vadd.f32 %v800, %v812
    %v814 = vpop.f32.mrf.mxu0
    %815 = vdwg.mxu0
    %816 = vmatpush.bf16.msra.mxu0 %v660
    %817 = vmatpush.bf16.msra.mxu0 %v659
    %818 = vmatpush.bf16.msra.mxu0 %v658
    %819 = vmatpush.bf16.msra.mxu0 %v657
    %820 = vmatpush.bf16.msra.mxu0 %v656
    %821 = vmatpush.bf16.msra.mxu0 %v655
    %822 = vmatpush.bf16.msra.mxu0 %v654
    %823 = vmatpush.bf16.msra.mxu0 %v653
    %824 = vmatmul.bf16.gmra.mxu0 %v332
    %v825 = vpop.f32.mrf.mxu0
    %v826 = vadd.f32 %v813, %v825
    %v827 = vpop.f32.mrf.mxu0
    %828 = vdwg.mxu0
    %v829 = vmax.f32 %v826, 0.0
    %v830 = vpack.c.bf16 %v829, %v829
    %v831 = vld [vmem:[#allocation8] sm:$0xf]
    %v832 = vld [vmem:[#allocation8 + $0x4] sm:$0xf]
    %v833 = vld [vmem:[#allocation8 + $0x8] sm:$0xf]
    %v834 = vld [vmem:[#allocation8 + $0xc] sm:$0xf]
    %v835 = vld [vmem:[#allocation8 + $0x10] sm:$0xf]
    %v836 = vld [vmem:[#allocation8 + $0x14] sm:$0xf]
    %v837 = vld [vmem:[#allocation8 + $0x18] sm:$0xf]
    %v838 = vld [vmem:[#allocation8 + $0x1c] sm:$0xf]
    %v839 = vld [vmem:[#allocation8 + $0x20] sm:$0xf]
    %v840 = vld [vmem:[#allocation8 + $0x24] sm:$0xf]
    %v841 = vld [vmem:[#allocation8 + $0x28] sm:$0xf]
    %v842 = vld [vmem:[#allocation8 + $0x2c] sm:$0xf]
    %v843 = vld [vmem:[#allocation8 + $0x30] sm:$0xf]
    %v844 = vld [vmem:[#allocation8 + $0x34] sm:$0xf]
    %v845 = vld [vmem:[#allocation8 + $0x38] sm:$0xf]
    %v846 = vld [vmem:[#allocation8 + $0x3c] sm:$0xf]
    %v847 = vld [vmem:[%s5] sm:$0x1]
    %v849 = vperm.slane %v847, 0
    %v867 = vunpack.c.l.b16 %v831
    %v868 = vunpack.c.l.b16 %v832
    %v869 = vunpack.c.l.b16 %v833
    %v870 = vunpack.c.l.b16 %v834
    %v871 = vunpack.c.l.b16 %v835
    %v872 = vunpack.c.l.b16 %v836
    %v873 = vunpack.c.l.b16 %v837
    %v874 = vunpack.c.l.b16 %v838
    %v875 = vunpack.c.l.b16 %v839
    %v876 = vunpack.c.l.b16 %v840
    %v877 = vunpack.c.l.b16 %v841
    %v878 = vunpack.c.l.b16 %v842
    %v879 = vunpack.c.l.b16 %v843
    %v880 = vunpack.c.l.b16 %v844
    %v881 = vunpack.c.l.b16 %v845
    %v882 = vunpack.c.l.b16 %v846
    %v883 = vpack.c.b16 %v868, %v867
    %v884 = vpack.c.b16 %v870, %v869
    %v885 = vpack.c.b16 %v872, %v871
    %v886 = vpack.c.b16 %v874, %v873
    %v887 = vpack.c.b16 %v876, %v875
    %v888 = vpack.c.b16 %v878, %v877
    %v889 = vpack.c.b16 %v880, %v879
    %v890 = vpack.c.b16 %v882, %v881
    %899 = vmatpush.bf16.msra.mxu0 %v890
    %900 = vmatpush.bf16.msra.mxu0 %v889
    %901 = vmatpush.bf16.msra.mxu0 %v888
    %902 = vmatpush.bf16.msra.mxu0 %v887
    %903 = vmatpush.bf16.msra.mxu0 %v886
    %904 = vmatpush.bf16.msra.mxu0 %v885
    %905 = vmatpush.bf16.msra.mxu0 %v884
    %906 = vmatpush.bf16.msra.mxu0 %v883
    %907 = vmatmul.bf16.gmra.mxu0 %v830
    %v908 = vpop.f32.mrf.mxu0
    %v909 = vadd.f32 %v849, %v908
    %v910 = vpop.f32.mrf.mxu0
    %911 = vdwg.mxu0
    %v912 = vld [vmem:[#allocation10] sm:$0xf]
    %v913 = vld [vmem:[#allocation10 + $0x4] sm:$0xf]
    %v914 = vld [vmem:[#allocation10 + $0x8] sm:$0xf]
    %v915 = vld [vmem:[#allocation10 + $0xc] sm:$0xf]
    %v916 = vld [vmem:[#allocation10 + $0x10] sm:$0xf]
    %v917 = vld [vmem:[#allocation10 + $0x14] sm:$0xf]
    %v918 = vld [vmem:[#allocation10 + $0x18] sm:$0xf]
    %v919 = vld [vmem:[#allocation10 + $0x1c] sm:$0xf]
    %v920 = vld [vmem:[#allocation10 + $0x20] sm:$0xf]
    %v921 = vld [vmem:[#allocation10 + $0x24] sm:$0xf]
    %v922 = vld [vmem:[#allocation10 + $0x28] sm:$0xf]
    %v923 = vld [vmem:[#allocation10 + $0x2c] sm:$0xf]
    %v924 = vld [vmem:[#allocation10 + $0x30] sm:$0xf]
    %v925 = vld [vmem:[#allocation10 + $0x34] sm:$0xf]
    %v926 = vld [vmem:[#allocation10 + $0x38] sm:$0xf]
    %v927 = vld [vmem:[#allocation10 + $0x3c] sm:$0xf]
    %v928 = vld [vmem:[#allocation11] sm:$0x1]
    %v930 = vperm.slane %v928, 0
    %v948 = vunpack.c.l.b16 %v912
    %v949 = vunpack.c.l.b16 %v913
    %v950 = vunpack.c.l.b16 %v914
    %v951 = vunpack.c.l.b16 %v915
    %v952 = vunpack.c.l.b16 %v916
    %v953 = vunpack.c.l.b16 %v917
    %v954 = vunpack.c.l.b16 %v918
    %v955 = vunpack.c.l.b16 %v919
    %v956 = vunpack.c.l.b16 %v920
    %v957 = vunpack.c.l.b16 %v921
    %v958 = vunpack.c.l.b16 %v922
    %v959 = vunpack.c.l.b16 %v923
    %v960 = vunpack.c.l.b16 %v924
    %v961 = vunpack.c.l.b16 %v925
    %v962 = vunpack.c.l.b16 %v926
    %v963 = vunpack.c.l.b16 %v927
    %v964 = vpack.c.b16 %v949, %v948
    %v965 = vpack.c.b16 %v951, %v950
    %v966 = vpack.c.b16 %v953, %v952
    %v967 = vpack.c.b16 %v955, %v954
    %v968 = vpack.c.b16 %v957, %v956
    %v969 = vpack.c.b16 %v959, %v958
    %v970 = vpack.c.b16 %v961, %v960
    %v971 = vpack.c.b16 %v963, %v962
    %980 = vmatpush.bf16.msra.mxu0 %v971
    %981 = vmatpush.bf16.msra.mxu0 %v970
    %982 = vmatpush.bf16.msra.mxu0 %v969
    %983 = vmatpush.bf16.msra.mxu0 %v968
    %984 = vmatpush.bf16.msra.mxu0 %v967
    %985 = vmatpush.bf16.msra.mxu0 %v966
    %986 = vmatpush.bf16.msra.mxu0 %v965
    %987 = vmatpush.bf16.msra.mxu0 %v964
    %988 = vmatmul.bf16.gmra.mxu0 %v830
    %v989 = vpop.f32.mrf.mxu0
    %v990 = vadd.f32 %v930, %v989
    %v991 = vpop.f32.mrf.mxu0
    %992 = vdwg.mxu0
    %v993 = vmul.f32 %v990, 0.5
    %v994 = vmul.f32 %v993, 1.442695
    %v995 = vpow.pop %v994
    %v996 = vld [vmem:[#allocation5] sm:$0xff]
    %v997 = vmul.f32 %v995, %v996
    %v998 = vadd.f32 %v909, %v997
    %v999 = vmul.f32 %v995, %v995
    %v1000 = vmul.f32 %v909, %v909
    %v1001 = vadd.f32 %v999, %v1000
    %v1002 = vsub.f32 %v1001, 1.0
    %v1003 = vsub.f32 %v1002, %v990
    %1004 = vadd.xlane.f32.xlu0 %v1003
    %v1005 = vpop.xlane.xlu0 %1004
    %v1006 = vmul.f32 %v1005, 0.5
    %v1007 = vpack.c.bf16 %v998, %v998
    %v1008 = vld [vmem:[#allocation13] sm:$0xf]
    %v1009 = vld [vmem:[#allocation13 + $0x4] sm:$0xf]
    %v1010 = vld [vmem:[#allocation13 + $0x8] sm:$0xf]
    %v1011 = vld [vmem:[#allocation13 + $0xc] sm:$0xf]
    %v1012 = vld [vmem:[#allocation13 + $0x10] sm:$0xf]
    %v1013 = vld [vmem:[#allocation13 + $0x14] sm:$0xf]
    %v1014 = vld [vmem:[#allocation13 + $0x18] sm:$0xf]
    %v1015 = vld [vmem:[#allocation13 + $0x1c] sm:$0xf]
    %v1016 = vld [vmem:[#allocation13 + $0x20] sm:$0xf]
    %v1017 = vld [vmem:[#allocation13 + $0x24] sm:$0xf]
    %v1018 = vld [vmem:[#allocation13 + $0x28] sm:$0xf]
    %v1019 = vld [vmem:[#allocation13 + $0x2c] sm:$0xf]
    %v1020 = vld [vmem:[#allocation13 + $0x30] sm:$0xf]
    %v1021 = vld [vmem:[#allocation13 + $0x34] sm:$0xf]
    %v1022 = vld [vmem:[#allocation13 + $0x38] sm:$0xf]
    %v1023 = vld [vmem:[#allocation13 + $0x3c] sm:$0xf]
    %v1024 = vld [vmem:[#allocation14] sm:$0x1]
    %v1026 = vperm.slane %v1024, 0
    %v1044 = vunpack.c.l.b16 %v1008
    %v1045 = vunpack.c.l.b16 %v1009
    %v1046 = vunpack.c.l.b16 %v1010
    %v1047 = vunpack.c.l.b16 %v1011
    %v1048 = vunpack.c.l.b16 %v1012
    %v1049 = vunpack.c.l.b16 %v1013
    %v1050 = vunpack.c.l.b16 %v1014
    %v1051 = vunpack.c.l.b16 %v1015
    %v1052 = vunpack.c.l.b16 %v1016
    %v1053 = vunpack.c.l.b16 %v1017
    %v1054 = vunpack.c.l.b16 %v1018
    %v1055 = vunpack.c.l.b16 %v1019
    %v1056 = vunpack.c.l.b16 %v1020
    %v1057 = vunpack.c.l.b16 %v1021
    %v1058 = vunpack.c.l.b16 %v1022
    %v1059 = vunpack.c.l.b16 %v1023
    %v1060 = vpack.c.b16 %v1045, %v1044
    %v1061 = vpack.c.b16 %v1047, %v1046
    %v1062 = vpack.c.b16 %v1049, %v1048
    %v1063 = vpack.c.b16 %v1051, %v1050
    %v1064 = vpack.c.b16 %v1053, %v1052
    %v1065 = vpack.c.b16 %v1055, %v1054
    %v1066 = vpack.c.b16 %v1057, %v1056
    %v1067 = vpack.c.b16 %v1059, %v1058
    %1076 = vmatpush.bf16.msra.mxu0 %v1067
    %1077 = vmatpush.bf16.msra.mxu0 %v1066
    %1078 = vmatpush.bf16.msra.mxu0 %v1065
    %1079 = vmatpush.bf16.msra.mxu0 %v1064
    %1080 = vmatpush.bf16.msra.mxu0 %v1063
    %1081 = vmatpush.bf16.msra.mxu0 %v1062
    %1082 = vmatpush.bf16.msra.mxu0 %v1061
    %1083 = vmatpush.bf16.msra.mxu0 %v1060
    %1084 = vmatmul.bf16.gmra.mxu0 %v1007
    %v1085 = vpop.f32.mrf.mxu0
    %v1086 = vadd.f32 %v1026, %v1085
    %v1087 = vpop.f32.mrf.mxu0
    %1088 = vdwg.mxu0
    %v1089 = vmax.f32 %v1086, 0.0
    %v1090 = vpack.c.bf16 %v1089, %v1089
    %v1091 = vld [vmem:[#allocation16] sm:$0xff]
    %v1092 = vld [vmem:[#allocation16 + $0x8] sm:$0xff]
    %v1093 = vld [vmem:[#allocation16 + $0x10] sm:$0xff]
    %v1094 = vld [vmem:[#allocation16 + $0x18] sm:$0xff]
    %v1095 = vld [vmem:[#allocation16 + $0x20] sm:$0xff]
    %v1096 = vld [vmem:[#allocation16 + $0x28] sm:$0xff]
    %v1097 = vld [vmem:[#allocation16 + $0x30] sm:$0xff]
    %v1098 = vld [vmem:[#allocation16 + $0x38] sm:$0xff]
    %v1099 = vld [vmem:[#allocation16 + $0x40] sm:$0xff]
    %v1100 = vld [vmem:[#allocation16 + $0x48] sm:$0xff]
    %v1101 = vld [vmem:[#allocation16 + $0x50] sm:$0xff]
    %v1102 = vld [vmem:[#allocation16 + $0x58] sm:$0xff]
    %v1103 = vld [vmem:[#allocation16 + $0x60] sm:$0xff]
    %v1104 = vld [vmem:[#allocation16 + $0x68] sm:$0xff]
    %v1105 = vld [vmem:[#allocation16 + $0x70] sm:$0xff]
    %v1106 = vld [vmem:[#allocation16 + $0x78] sm:$0xff]
    %v1107 = vld [vmem:[#allocation16 + $0x80] sm:$0xff]
    %v1108 = vld [vmem:[#allocation16 + $0x88] sm:$0xff]
    %v1109 = vld [vmem:[#allocation16 + $0x90] sm:$0xff]
    %v1110 = vld [vmem:[#allocation16 + $0x98] sm:$0xff]
    %v1111 = vld [vmem:[#allocation16 + $0xa0] sm:$0xff]
    %v1112 = vld [vmem:[#allocation16 + $0xa8] sm:$0xff]
    %v1113 = vld [vmem:[#allocation16 + $0xb0] sm:$0xff]
    %v1114 = vld [vmem:[#allocation16 + $0xb8] sm:$0xff]
    %v1115 = vld [vmem:[#allocation16 + $0xc0] sm:$0xff]
    %v1116 = vld [vmem:[#allocation16 + $0xc8] sm:$0xff]
    %v1117 = vld [vmem:[#allocation16 + $0xd0] sm:$0xff]
    %v1118 = vld [vmem:[#allocation16 + $0xd8] sm:$0xff]
    %v1119 = vld [vmem:[#allocation16 + $0xe0] sm:$0xff]
    %v1120 = vld [vmem:[#allocation16 + $0xe8] sm:$0xff]
    %v1121 = vld [vmem:[#allocation16 + $0xf0] sm:$0xff]
    %v1122 = vld [vmem:[#allocation16 + $0xf8] sm:$0xff]
    %v1123 = vld [vmem:[#allocation16 + $0x100] sm:$0xff]
    %v1124 = vld [vmem:[#allocation16 + $0x108] sm:$0xff]
    %v1125 = vld [vmem:[#allocation16 + $0x110] sm:$0xff]
    %v1126 = vld [vmem:[#allocation16 + $0x118] sm:$0xff]
    %v1127 = vld [vmem:[#allocation16 + $0x120] sm:$0xff]
    %v1128 = vld [vmem:[#allocation16 + $0x128] sm:$0xff]
    %v1129 = vld [vmem:[#allocation16 + $0x130] sm:$0xff]
    %v1130 = vld [vmem:[#allocation16 + $0x138] sm:$0xff]
    %v1131 = vld [vmem:[#allocation16 + $0x140] sm:$0xff]
    %v1132 = vld [vmem:[#allocation16 + $0x148] sm:$0xff]
    %v1133 = vld [vmem:[#allocation16 + $0x150] sm:$0xff]
    %v1134 = vld [vmem:[#allocation16 + $0x158] sm:$0xff]
    %v1135 = vld [vmem:[#allocation16 + $0x160] sm:$0xff]
    %v1136 = vld [vmem:[#allocation16 + $0x168] sm:$0xff]
    %v1137 = vld [vmem:[#allocation16 + $0x170] sm:$0xff]
    %v1138 = vld [vmem:[#allocation16 + $0x178] sm:$0xff]
    %v1139 = vld [vmem:[#allocation16 + $0x180] sm:$0xff]
    %v1140 = vld [vmem:[#allocation16 + $0x188] sm:$0xff]
    %v1141 = vld [vmem:[#allocation16 + $0x190] sm:$0xff]
    %v1142 = vld [vmem:[#allocation16 + $0x198] sm:$0xff]
    %v1143 = vld [vmem:[#allocation16 + $0x1a0] sm:$0xff]
    %v1144 = vld [vmem:[#allocation16 + $0x1a8] sm:$0xff]
    %v1145 = vld [vmem:[#allocation16 + $0x1b0] sm:$0xff]
    %v1146 = vld [vmem:[#allocation16 + $0x1b8] sm:$0xff]
    %v1147 = vld [vmem:[#allocation16 + $0x1c0] sm:$0xff]
    %v1148 = vld [vmem:[#allocation16 + $0x1c8] sm:$0xff]
    %v1149 = vld [vmem:[#allocation16 + $0x1d0] sm:$0xff]
    %v1150 = vld [vmem:[#allocation16 + $0x1d8] sm:$0xff]
    %v1151 = vld [vmem:[#allocation16 + $0x1e0] sm:$0xff]
    %v1152 = vld [vmem:[#allocation16 + $0x1e8] sm:$0xff]
    %v1153 = vld [vmem:[#allocation16 + $0x1f0] sm:$0xff]
    %v1154 = vld [vmem:[#allocation16 + $0x1f8] sm:$0xff]
    %v1155 = vld [vmem:[%s11] sm:$0xff]
    %v1157 = vperm.slane %v1155, 0
    %v1158 = vperm.slane %v1155, 1
    %v1159 = vperm.slane %v1155, 2
    %v1160 = vperm.slane %v1155, 3
    %v1161 = vperm.slane %v1155, 4
    %v1162 = vperm.slane %v1155, 5
    %v1163 = vperm.slane %v1155, 6
    %v1164 = vperm.slane %v1155, 7
    %v1237 = vunpack.c.l.b16 %v1091
    %v1238 = vunpack.c.h.b16 %v1091
    %v1239 = vunpack.c.l.b16 %v1092
    %v1240 = vunpack.c.h.b16 %v1092
    %v1241 = vunpack.c.l.b16 %v1093
    %v1242 = vunpack.c.h.b16 %v1093
    %v1243 = vunpack.c.l.b16 %v1094
    %v1244 = vunpack.c.h.b16 %v1094
    %v1245 = vunpack.c.l.b16 %v1095
    %v1246 = vunpack.c.h.b16 %v1095
    %v1247 = vunpack.c.l.b16 %v1096
    %v1248 = vunpack.c.h.b16 %v1096
    %v1249 = vunpack.c.l.b16 %v1097
    %v1250 = vunpack.c.h.b16 %v1097
    %v1251 = vunpack.c.l.b16 %v1098
    %v1252 = vunpack.c.h.b16 %v1098
    %v1253 = vunpack.c.l.b16 %v1099
    %v1254 = vunpack.c.h.b16 %v1099
    %v1255 = vunpack.c.l.b16 %v1100
    %v1256 = vunpack.c.h.b16 %v1100
    %v1257 = vunpack.c.l.b16 %v1101
    %v1258 = vunpack.c.h.b16 %v1101
    %v1259 = vunpack.c.l.b16 %v1102
    %v1260 = vunpack.c.h.b16 %v1102
    %v1261 = vunpack.c.l.b16 %v1103
    %v1262 = vunpack.c.h.b16 %v1103
    %v1263 = vunpack.c.l.b16 %v1104
    %v1264 = vunpack.c.h.b16 %v1104
    %v1265 = vunpack.c.l.b16 %v1105
    %v1266 = vunpack.c.h.b16 %v1105
    %v1267 = vunpack.c.l.b16 %v1106
    %v1268 = vunpack.c.h.b16 %v1106
    %v1269 = vunpack.c.l.b16 %v1107
    %v1270 = vunpack.c.h.b16 %v1107
    %v1271 = vunpack.c.l.b16 %v1108
    %v1272 = vunpack.c.h.b16 %v1108
    %v1273 = vunpack.c.l.b16 %v1109
    %v1274 = vunpack.c.h.b16 %v1109
    %v1275 = vunpack.c.l.b16 %v1110
    %v1276 = vunpack.c.h.b16 %v1110
    %v1277 = vunpack.c.l.b16 %v1111
    %v1278 = vunpack.c.h.b16 %v1111
    %v1279 = vunpack.c.l.b16 %v1112
    %v1280 = vunpack.c.h.b16 %v1112
    %v1281 = vunpack.c.l.b16 %v1113
    %v1282 = vunpack.c.h.b16 %v1113
    %v1283 = vunpack.c.l.b16 %v1114
    %v1284 = vunpack.c.h.b16 %v1114
    %v1285 = vunpack.c.l.b16 %v1115
    %v1286 = vunpack.c.h.b16 %v1115
    %v1287 = vunpack.c.l.b16 %v1116
    %v1288 = vunpack.c.h.b16 %v1116
    %v1289 = vunpack.c.l.b16 %v1117
    %v1290 = vunpack.c.h.b16 %v1117
    %v1291 = vunpack.c.l.b16 %v1118
    %v1292 = vunpack.c.h.b16 %v1118
    %v1293 = vunpack.c.l.b16 %v1119
    %v1294 = vunpack.c.h.b16 %v1119
    %v1295 = vunpack.c.l.b16 %v1120
    %v1296 = vunpack.c.h.b16 %v1120
    %v1297 = vunpack.c.l.b16 %v1121
    %v1298 = vunpack.c.h.b16 %v1121
    %v1299 = vunpack.c.l.b16 %v1122
    %v1300 = vunpack.c.h.b16 %v1122
    %v1301 = vunpack.c.l.b16 %v1123
    %v1302 = vunpack.c.h.b16 %v1123
    %v1303 = vunpack.c.l.b16 %v1124
    %v1304 = vunpack.c.h.b16 %v1124
    %v1305 = vunpack.c.l.b16 %v1125
    %v1306 = vunpack.c.h.b16 %v1125
    %v1307 = vunpack.c.l.b16 %v1126
    %v1308 = vunpack.c.h.b16 %v1126
    %v1309 = vunpack.c.l.b16 %v1127
    %v1310 = vunpack.c.h.b16 %v1127
    %v1311 = vunpack.c.l.b16 %v1128
    %v1312 = vunpack.c.h.b16 %v1128
    %v1313 = vunpack.c.l.b16 %v1129
    %v1314 = vunpack.c.h.b16 %v1129
    %v1315 = vunpack.c.l.b16 %v1130
    %v1316 = vunpack.c.h.b16 %v1130
    %v1317 = vunpack.c.l.b16 %v1131
    %v1318 = vunpack.c.h.b16 %v1131
    %v1319 = vunpack.c.l.b16 %v1132
    %v1320 = vunpack.c.h.b16 %v1132
    %v1321 = vunpack.c.l.b16 %v1133
    %v1322 = vunpack.c.h.b16 %v1133
    %v1323 = vunpack.c.l.b16 %v1134
    %v1324 = vunpack.c.h.b16 %v1134
    %v1325 = vunpack.c.l.b16 %v1135
    %v1326 = vunpack.c.h.b16 %v1135
    %v1327 = vunpack.c.l.b16 %v1136
    %v1328 = vunpack.c.h.b16 %v1136
    %v1329 = vunpack.c.l.b16 %v1137
    %v1330 = vunpack.c.h.b16 %v1137
    %v1331 = vunpack.c.l.b16 %v1138
    %v1332 = vunpack.c.h.b16 %v1138
    %v1333 = vunpack.c.l.b16 %v1139
    %v1334 = vunpack.c.h.b16 %v1139
    %v1335 = vunpack.c.l.b16 %v1140
    %v1336 = vunpack.c.h.b16 %v1140
    %v1337 = vunpack.c.l.b16 %v1141
    %v1338 = vunpack.c.h.b16 %v1141
    %v1339 = vunpack.c.l.b16 %v1142
    %v1340 = vunpack.c.h.b16 %v1142
    %v1341 = vunpack.c.l.b16 %v1143
    %v1342 = vunpack.c.h.b16 %v1143
    %v1343 = vunpack.c.l.b16 %v1144
    %v1344 = vunpack.c.h.b16 %v1144
    %v1345 = vunpack.c.l.b16 %v1145
    %v1346 = vunpack.c.h.b16 %v1145
    %v1347 = vunpack.c.l.b16 %v1146
    %v1348 = vunpack.c.h.b16 %v1146
    %v1349 = vunpack.c.l.b16 %v1147
    %v1350 = vunpack.c.h.b16 %v1147
    %v1351 = vunpack.c.l.b16 %v1148
    %v1352 = vunpack.c.h.b16 %v1148
    %v1353 = vunpack.c.l.b16 %v1149
    %v1354 = vunpack.c.h.b16 %v1149
    %v1355 = vunpack.c.l.b16 %v1150
    %v1356 = vunpack.c.h.b16 %v1150
    %v1357 = vunpack.c.l.b16 %v1151
    %v1358 = vunpack.c.h.b16 %v1151
    %v1359 = vunpack.c.l.b16 %v1152
    %v1360 = vunpack.c.h.b16 %v1152
    %v1361 = vunpack.c.l.b16 %v1153
    %v1362 = vunpack.c.h.b16 %v1153
    %v1363 = vunpack.c.l.b16 %v1154
    %v1364 = vunpack.c.h.b16 %v1154
    %v1365 = vpack.c.b16 %v1245, %v1237
    %v1366 = vpack.c.b16 %v1246, %v1238
    %v1367 = vpack.c.b16 %v1247, %v1239
    %v1368 = vpack.c.b16 %v1248, %v1240
    %v1369 = vpack.c.b16 %v1249, %v1241
    %v1370 = vpack.c.b16 %v1250, %v1242
    %v1371 = vpack.c.b16 %v1251, %v1243
    %v1372 = vpack.c.b16 %v1252, %v1244
    %v1373 = vpack.c.b16 %v1261, %v1253
    %v1374 = vpack.c.b16 %v1262, %v1254
    %v1375 = vpack.c.b16 %v1263, %v1255
    %v1376 = vpack.c.b16 %v1264, %v1256
    %v1377 = vpack.c.b16 %v1265, %v1257
    %v1378 = vpack.c.b16 %v1266, %v1258
    %v1379 = vpack.c.b16 %v1267, %v1259
    %v1380 = vpack.c.b16 %v1268, %v1260
    %v1381 = vpack.c.b16 %v1277, %v1269
    %v1382 = vpack.c.b16 %v1278, %v1270
    %v1383 = vpack.c.b16 %v1279, %v1271
    %v1384 = vpack.c.b16 %v1280, %v1272
    %v1385 = vpack.c.b16 %v1281, %v1273
    %v1386 = vpack.c.b16 %v1282, %v1274
    %v1387 = vpack.c.b16 %v1283, %v1275
    %v1388 = vpack.c.b16 %v1284, %v1276
    %v1389 = vpack.c.b16 %v1293, %v1285
    %v1390 = vpack.c.b16 %v1294, %v1286
    %v1391 = vpack.c.b16 %v1295, %v1287
    %v1392 = vpack.c.b16 %v1296, %v1288
    %v1393 = vpack.c.b16 %v1297, %v1289
    %v1394 = vpack.c.b16 %v1298, %v1290
    %v1395 = vpack.c.b16 %v1299, %v1291
    %v1396 = vpack.c.b16 %v1300, %v1292
    %v1397 = vpack.c.b16 %v1309, %v1301
    %v1398 = vpack.c.b16 %v1310, %v1302
    %v1399 = vpack.c.b16 %v1311, %v1303
    %v1400 = vpack.c.b16 %v1312, %v1304
    %v1401 = vpack.c.b16 %v1313, %v1305
    %v1402 = vpack.c.b16 %v1314, %v1306
    %v1403 = vpack.c.b16 %v1315, %v1307
    %v1404 = vpack.c.b16 %v1316, %v1308
    %v1405 = vpack.c.b16 %v1325, %v1317
    %v1406 = vpack.c.b16 %v1326, %v1318
    %v1407 = vpack.c.b16 %v1327, %v1319
    %v1408 = vpack.c.b16 %v1328, %v1320
    %v1409 = vpack.c.b16 %v1329, %v1321
    %v1410 = vpack.c.b16 %v1330, %v1322
    %v1411 = vpack.c.b16 %v1331, %v1323
    %v1412 = vpack.c.b16 %v1332, %v1324
    %v1413 = vpack.c.b16 %v1341, %v1333
    %v1414 = vpack.c.b16 %v1342, %v1334
    %v1415 = vpack.c.b16 %v1343, %v1335
    %v1416 = vpack.c.b16 %v1344, %v1336
    %v1417 = vpack.c.b16 %v1345, %v1337
    %v1418 = vpack.c.b16 %v1346, %v1338
    %v1419 = vpack.c.b16 %v1347, %v1339
    %v1420 = vpack.c.b16 %v1348, %v1340
    %v1421 = vpack.c.b16 %v1357, %v1349
    %v1422 = vpack.c.b16 %v1358, %v1350
    %v1423 = vpack.c.b16 %v1359, %v1351
    %v1424 = vpack.c.b16 %v1360, %v1352
    %v1425 = vpack.c.b16 %v1361, %v1353
    %v1426 = vpack.c.b16 %v1362, %v1354
    %v1427 = vpack.c.b16 %v1363, %v1355
    %v1428 = vpack.c.b16 %v1364, %v1356
    %1493 = vmatpush.bf16.msra.mxu0 %v1421
    %1494 = vmatpush.bf16.msra.mxu0 %v1413
    %1495 = vmatpush.bf16.msra.mxu0 %v1405
    %1496 = vmatpush.bf16.msra.mxu0 %v1397
    %1497 = vmatpush.bf16.msra.mxu0 %v1389
    %1498 = vmatpush.bf16.msra.mxu0 %v1381
    %1499 = vmatpush.bf16.msra.mxu0 %v1373
    %1500 = vmatpush.bf16.msra.mxu0 %v1365
    %1501 = vmatmul.bf16.gmra.mxu0 %v1090
    %v1502 = vpop.f32.mrf.mxu0
    %v1503 = vadd.f32 %v1157, %v1502
    %v1504 = vpop.f32.mrf.mxu0
    %1505 = vdwg.mxu0
    %1506 = vmatpush.bf16.msra.mxu0 %v1422
    %1507 = vmatpush.bf16.msra.mxu0 %v1414
    %1508 = vmatpush.bf16.msra.mxu0 %v1406
    %1509 = vmatpush.bf16.msra.mxu0 %v1398
    %1510 = vmatpush.bf16.msra.mxu0 %v1390
    %1511 = vmatpush.bf16.msra.mxu0 %v1382
    %1512 = vmatpush.bf16.msra.mxu0 %v1374
    %1513 = vmatpush.bf16.msra.mxu0 %v1366
    %1514 = vmatmul.bf16.gmra.mxu0 %v1090
    %v1515 = vpop.f32.mrf.mxu0
    %v1516 = vadd.f32 %v1158, %v1515
    %v1517 = vpop.f32.mrf.mxu0
    %1518 = vdwg.mxu0
    %1519 = vmatpush.bf16.msra.mxu0 %v1423
    %1520 = vmatpush.bf16.msra.mxu0 %v1415
    %1521 = vmatpush.bf16.msra.mxu0 %v1407
    %1522 = vmatpush.bf16.msra.mxu0 %v1399
    %1523 = vmatpush.bf16.msra.mxu0 %v1391
    %1524 = vmatpush.bf16.msra.mxu0 %v1383
    %1525 = vmatpush.bf16.msra.mxu0 %v1375
    %1526 = vmatpush.bf16.msra.mxu0 %v1367
    %1527 = vmatmul.bf16.gmra.mxu0 %v1090
    %v1528 = vpop.f32.mrf.mxu0
    %v1529 = vadd.f32 %v1159, %v1528
    %v1530 = vpop.f32.mrf.mxu0
    %1531 = vdwg.mxu0
    %1532 = vmatpush.bf16.msra.mxu0 %v1424
    %1533 = vmatpush.bf16.msra.mxu0 %v1416
    %1534 = vmatpush.bf16.msra.mxu0 %v1408
    %1535 = vmatpush.bf16.msra.mxu0 %v1400
    %1536 = vmatpush.bf16.msra.mxu0 %v1392
    %1537 = vmatpush.bf16.msra.mxu0 %v1384
    %1538 = vmatpush.bf16.msra.mxu0 %v1376
    %1539 = vmatpush.bf16.msra.mxu0 %v1368
    %1540 = vmatmul.bf16.gmra.mxu0 %v1090
    %v1541 = vpop.f32.mrf.mxu0
    %v1542 = vadd.f32 %v1160, %v1541
    %v1543 = vpop.f32.mrf.mxu0
    %1544 = vdwg.mxu0
    %1545 = vmatpush.bf16.msra.mxu0 %v1425
    %1546 = vmatpush.bf16.msra.mxu0 %v1417
    %1547 = vmatpush.bf16.msra.mxu0 %v1409
    %1548 = vmatpush.bf16.msra.mxu0 %v1401
    %1549 = vmatpush.bf16.msra.mxu0 %v1393
    %1550 = vmatpush.bf16.msra.mxu0 %v1385
    %1551 = vmatpush.bf16.msra.mxu0 %v1377
    %1552 = vmatpush.bf16.msra.mxu0 %v1369
    %1553 = vmatmul.bf16.gmra.mxu0 %v1090
    %v1554 = vpop.f32.mrf.mxu0
    %v1555 = vadd.f32 %v1161, %v1554
    %v1556 = vpop.f32.mrf.mxu0
    %1557 = vdwg.mxu0
    %1558 = vmatpush.bf16.msra.mxu0 %v1426
    %1559 = vmatpush.bf16.msra.mxu0 %v1418
    %1560 = vmatpush.bf16.msra.mxu0 %v1410
    %1561 = vmatpush.bf16.msra.mxu0 %v1402
    %1562 = vmatpush.bf16.msra.mxu0 %v1394
    %1563 = vmatpush.bf16.msra.mxu0 %v1386
    %1564 = vmatpush.bf16.msra.mxu0 %v1378
    %1565 = vmatpush.bf16.msra.mxu0 %v1370
    %1566 = vmatmul.bf16.gmra.mxu0 %v1090
    %v1567 = vpop.f32.mrf.mxu0
    %v1568 = vadd.f32 %v1162, %v1567
    %v1569 = vpop.f32.mrf.mxu0
    %1570 = vdwg.mxu0
    %1571 = vmatpush.bf16.msra.mxu0 %v1427
    %1572 = vmatpush.bf16.msra.mxu0 %v1419
    %1573 = vmatpush.bf16.msra.mxu0 %v1411
    %1574 = vmatpush.bf16.msra.mxu0 %v1403
    %1575 = vmatpush.bf16.msra.mxu0 %v1395
    %1576 = vmatpush.bf16.msra.mxu0 %v1387
    %1577 = vmatpush.bf16.msra.mxu0 %v1379
    %1578 = vmatpush.bf16.msra.mxu0 %v1371
    %1579 = vmatmul.bf16.gmra.mxu0 %v1090
    %v1580 = vpop.f32.mrf.mxu0
    %v1581 = vadd.f32 %v1163, %v1580
    %v1582 = vpop.f32.mrf.mxu0
    %1583 = vdwg.mxu0
    %1584 = vmatpush.bf16.msra.mxu0 %v1428
    %1585 = vmatpush.bf16.msra.mxu0 %v1420
    %1586 = vmatpush.bf16.msra.mxu0 %v1412
    %1587 = vmatpush.bf16.msra.mxu0 %v1404
    %1588 = vmatpush.bf16.msra.mxu0 %v1396
    %1589 = vmatpush.bf16.msra.mxu0 %v1388
    %1590 = vmatpush.bf16.msra.mxu0 %v1380
    %1591 = vmatpush.bf16.msra.mxu0 %v1372
    %1592 = vmatmul.bf16.gmra.mxu0 %v1090
    %v1593 = vpop.f32.mrf.mxu0
    %v1594 = vadd.f32 %v1164, %v1593
    %v1595 = vpop.f32.mrf.mxu0
    %1596 = vdwg.mxu0
    %1597 = vst [vmem:[#allocation17] sm:$0xff] %v1503
    %1598 = vst [vmem:[#allocation17 + $0x8] sm:$0xff] %v1516
    %1599 = vst [vmem:[#allocation17 + $0x10] sm:$0xff] %v1529
    %1600 = vst [vmem:[#allocation17 + $0x18] sm:$0xff] %v1542
    %1601 = vst [vmem:[#allocation17 + $0x20] sm:$0xff] %v1555
    %1602 = vst [vmem:[#allocation17 + $0x28] sm:$0xff] %v1568
    %1603 = vst [vmem:[#allocation17 + $0x30] sm:$0xff] %v1581
    %1604 = vst [vmem:[#allocation17 + $0x38] sm:$0xff] %v1594
    %1605 = vst [vmem:[#allocation18] sm:$0xff] %v909
    %1606 = vst [vmem:[#allocation18 + $0x8] sm:$0xff] %v990
    %1607 = vst [vmem:[#allocation18 + $0x10] sm:$0xff] %v998
    %1608 = vst [vmem:[#allocation18 + $0x18] sm:$0xff] %v1006
    // Predicated region
    $region86: #{tpu_custom_call.1} parent=1 // pred_check
      _
    $region87: #{tpu_custom_call.1} parent=1 // pred_check_branch
      %1610 = sbr.rel (0) target = $region89
    $region88: #{tpu_custom_call.1} parent=1 // pred_region
      %1612 = vsyncadd [#allocation4], 0
      %s1614 = sshll.u32 [#allocation17], 4
      %s1615 = int_to_ptr.vmem [resolvable:$true] %s1614
      %s1616 = sshll.u32 %s12, 4
      %s1617 = int_to_ptr.hbm [resolvable:$true] %s1616
      %1619 = dma.vmem_to_hbm [thread:$0]  %s1615, 1024, %s1617, [#allocation4]
    $region89: #{tpu_custom_call.1} parent=1 // pred_fallthru
      _
    // Predicated region
    $region90: #{tpu_custom_call.1} parent=1 // pred_check
      _
    $region91: #{tpu_custom_call.1} parent=1 // pred_check_branch
      %1621 = sbr.rel (0) target = $region93
    $region92: #{tpu_custom_call.1} parent=1 // pred_region
      %1623 = vsyncadd [#allocation19], 0
      %s1625 = sshll.u32 [#allocation18], 4
      %s1626 = int_to_ptr.vmem [resolvable:$true] %s1625
      %s1627 = sshll.u32 %s13, 4
      %s1628 = int_to_ptr.hbm [resolvable:$true] %s1627
      %1630 = dma.vmem_to_hbm [thread:$0]  %s1626, 512, %s1628, [#allocation19]
    $region93: #{tpu_custom_call.1} parent=1 // pred_fallthru
      _
    // Predicated region
    $region94: #{tpu_custom_call.1} parent=1 // pred_check
      _
    $region95: #{tpu_custom_call.1} parent=1 // pred_check_branch
      %1632 = sbr.rel (0) target = $region97
    $region96: #{tpu_custom_call.1} parent=1 // pred_region
      %1634 = dma.done [#allocation4], 1024
    $region97: #{tpu_custom_call.1} parent=1 // pred_fallthru
      _
    // Predicated region
    $region98: #{tpu_custom_call.1} parent=1 // pred_check
      _
    $region99: #{tpu_custom_call.1} parent=1 // pred_check_branch
      %1636 = sbr.rel (0) target = $region101
    $region100: #{tpu_custom_call.1} parent=1 // pred_region
      %1638 = dma.done [#allocation19], 512
    $region101: #{tpu_custom_call.1} parent=1 // pred_fallthru
      _
    %1639 = vsyncpa [#allocation3], 1
    %1640 = vsyncpa [#allocation6], 1
    %1641 = vsyncpa [#allocation9], 1
    %1642 = vsyncpa [#allocation12], 1
    %1643 = vsyncpa [#allocation15], 1
    %1644 = vsyncpa [#allocation4], 1
    %1645 = vsyncpa [#allocation19], 1

</llo_original>
